<compile_context>
chip_gen: v7x
topology: tpu7x:2x2x1
jax: 0.10.0
libtpu: 0.0.40
codegen_flags: <defaults>
</compile_context>

<pallas_src>
import functools

import jax
import jax.numpy as jnp
from jax.experimental import pallas as pl
from jax.experimental.pallas import tpu as pltpu

# MXU operand dtype.  bf16 uses the native MXU on v5e/v6e/v7x and halves the
# VMEM / vreg / vld footprint of the matmul operands; accumulation is always
# f32 via preferred_element_type.  Set to jnp.float32 for strict 1e-3 parity
# with the f32 reference.
MXU_DTYPE = jnp.bfloat16


def _scconv_kernel(x_ref, pix_ref, grp_ref, sg_w_ref, sg_b_ref,
                   w_up_i_ref, w_up_n_ref, w_low_i_ref, w_low_n_ref,
                   w_gwc_ref, b_gwc_ref, w_y2_ref,
                   o_ref, taps_ref, *, H, W, gks, gn_eps, gate, us_pad):
    f32 = jnp.float32
    C, HW = x_ref.shape
    x = x_ref[...].astype(f32)
    mxu = w_up_i_ref.dtype

    # ---------------- SR unit ------------------------------------------------
    # GroupNorm group stats.  The (C,C)@(C,2) dot is a single tiny MXU pass;
    # the VPU/XLU alternatives need extra sublane relayouts, so it stays.
    ch_sum = jnp.sum(x, axis=-1, keepdims=True)                   # (C, 1)
    ch_sq = jnp.sum(x * x, axis=-1, keepdims=True)                # (C, 1)
    stats = jnp.dot(grp_ref[...],
                    jnp.concatenate([ch_sum, ch_sq], axis=-1),
                    preferred_element_type=f32)                   # (C, 2)
    g_mean = stats[:, 0:1]
    g_var = stats[:, 1:2] - g_mean * g_mean                       # biased var
    # gn*w_gamma folded host-side -> z = x*a + b (2 full-plane VPU ops).
    a = jax.lax.rsqrt(g_var + gn_eps) * sg_w_ref[...]             # (C, 1)
    b = sg_b_ref[...] - g_mean * a                                # (C, 1)
    rw = 1.0 / (1.0 + jnp.exp(-(x * a + b)))                      # sigmoid (EUP)
    keep = rw > gate
    rwx = rw * x
    info = jnp.where(keep, x, rwx)                                # info_mask * x
    non = jnp.where(keep, 0.0, rwx)                               # noninfo  * x
    info_m = info.astype(mxu)
    non_m = non.astype(mxu)

    # ---------------- CR unit: squeeze1 / squeeze2 ----------------------------
    # SRU half-swap + up/low split folded into the weights; no [info;non]
    # concat — two accumulating K=C matmuls per squeeze.
    up_s = (jnp.dot(w_up_i_ref[...], info_m, preferred_element_type=f32)
            + jnp.dot(w_up_n_ref[...], non_m, preferred_element_type=f32))
    low_s = (jnp.dot(w_low_i_ref[...], info_m, preferred_element_type=f32)
             + jnp.dot(w_low_n_ref[...], non_m, preferred_element_type=f32))

    # 9 spatial taps of up_s: lane rolls + border masks, written directly into
    # a sublane-aligned VMEM scratch (no im2col in HBM, no ragged concat).
    y_pix = pix_ref[0:1, :]                                       # (1, HW)
    x_pix = pix_ref[1:2, :]                                       # (1, HW)
    pad = gks // 2
    for ky in range(gks):
        for kx in range(gks):
            dy, dx = ky - pad, kx - pad
            d = dy * W + dx
            t = pltpu.roll(up_s, (-d) % HW, axis=1) if d != 0 else up_s
            valid = ((y_pix >= -dy) & (y_pix < H - dy) &
                     (x_pix >= -dx) & (x_pix < W - dx))
            k = ky * gks + kx
            taps_ref[k * us_pad:(k + 1) * us_pad, :] = (
                jnp.where(valid, t, 0.0).astype(taps_ref.dtype))

    # GWC (grouped 3x3) + PWC1 folded into ONE stacked weight -> one matmul.
    y1 = (jnp.dot(w_gwc_ref[...], taps_ref[...], preferred_element_type=f32)
          + b_gwc_ref[...])                                       # (C, HW)
    # Y2 = cat([PWC2(low_s), low_s]) via a single host-stacked [PWC2 ; I] weight.
    y2 = jnp.dot(w_y2_ref[...], low_s.astype(mxu),
                 preferred_element_type=f32)                      # (C, HW)

    # ------------- adaptive avg-pool + softmax over the 2C pooled channels ----
    inv_hw = 1.0 / (H * W)            # full plane per grid step
    p1 = jnp.sum(y1, axis=-1, keepdims=True) * inv_hw             # (C, 1)
    p2 = jnp.sum(y2, axis=-1, keepdims=True) * inv_hw             # (C, 1)
    m = jnp.maximum(jnp.max(p1, keepdims=True), jnp.max(p2, keepdims=True))
    e1 = jnp.exp(p1 - m)
    e2 = jnp.exp(p2 - m)
    inv_z = 1.0 / (jnp.sum(e1, keepdims=True) + jnp.sum(e2, keepdims=True))
    # out = s1*Y1 + s2*Y2 -> one full, lane-dense, sublane-aligned store.
    o_ref[...] = (y1 * (e1 * inv_z) + y2 * (e2 * inv_z)).astype(o_ref.dtype)


def _round_up(v, m):
    return ((v + m - 1) // m) * m


def _pick_vmem_limit_bytes():
    """~3/4 of physical VMEM (≈96 MiB v5e/v6e, ≈48 MiB v7x); None -> default."""
    try:
        cap = getattr(pltpu.get_tpu_info(), "vmem_capacity_bytes", None)
        if cap:
            return int(max(32 * 1024 * 1024, min(3 * cap // 4, 100 * 1024 * 1024)))
    except Exception:
        pass
    return None


def init_params(key, channels, *, alpha=0.5, squeeze_radio=2, groups=2,
                group_kernel_size=3):
    """Deterministic parameters in PyTorch layouts (conv weights are OIHW)."""
    up_c = int(alpha * channels)
    low_c = channels - up_c
    up_s = up_c // squeeze_radio
    low_s = low_c // squeeze_radio
    ks = jax.random.split(key, 8)
    return {
        "gn_w": jax.random.uniform(ks[0], (channels,), jnp.float32, 0.5, 1.5),
        "gn_b": jax.random.normal(ks[1], (channels,), jnp.float32) * 0.1,
        "squeeze1": jax.random.normal(ks[2], (up_s, up_c, 1, 1), jnp.float32) * 0.2,
        "squeeze2": jax.random.normal(ks[3], (low_s, low_c, 1, 1), jnp.float32) * 0.2,
        "gwc_w": jax.random.normal(
            ks[4], (channels, up_s // groups, group_kernel_size, group_kernel_size),
            jnp.float32) * 0.2,
        "gwc_b": jax.random.normal(ks[5], (channels,), jnp.float32) * 0.1,
        "pwc1": jax.random.normal(ks[6], (channels, up_s, 1, 1), jnp.float32) * 0.2,
        "pwc2": jax.random.normal(ks[7], (channels - low_s, low_s, 1, 1),
                                  jnp.float32) * 0.2,
    }


def scconv_forward(x, params, *, spatial_group_num=4, gate_threshold=0.5,
                   alpha=0.5, squeeze_radio=2, groups=2, group_kernel_size=3,
                   gn_eps=1e-5):
    """x: NCHW float32. Returns NCHW float32 (same semantics as the module)."""
    B, C, H, W = x.shape
    HW = H * W
    up_c = int(alpha * C)
    low_c = C - up_c
    up_s_c = up_c // squeeze_radio
    low_s_c = low_c // squeeze_radio
    gks = group_kernel_size
    h = C // 2
    f32 = jnp.float32
    assert C % 2 == 0 and C % spatial_group_num == 0
    assert up_s_c % groups == 0 and C % groups == 0
    assert up_s_c >= 1 and low_s_c >= 1

    # Sublane tile of the MXU operand dtype (8 for f32, 16 for bf16).
    sub_tile = 32 // jnp.dtype(MXU_DTYPE).itemsize
    us_pad = _round_up(up_s_c, sub_tile)
    ls_pad = _round_up(low_s_c, sub_tile)

    # ---- host-side parameter folding (one-time weight algebra) --------------
    # GroupNorm group-average matrix, 1/(Cg*HW) normaliser folded in.
    cg = C // spatial_group_num
    grp = jnp.zeros((C, C), f32)
    for g in range(spatial_group_num):
        grp = grp.at[g * cg:(g + 1) * cg, g * cg:(g + 1) * cg].set(1.0 / (cg * HW))
    # gn*w_gamma -> sigmoid, folded scale/bias: z = x_hat*sg_w + sg_b.
    w_gamma = params["gn_w"] / jnp.sum(params["gn_w"])
    sg_w = (params["gn_w"] * w_gamma).reshape(C, 1).astype(f32)
    sg_b = (params["gn_b"] * w_gamma).reshape(C, 1).astype(f32)

    # squeeze1/squeeze2: fold the CRU up/low channel selection and the SRU
    # half-swap reconstruct; keep the info/non halves as SEPARATE matrices
    # (no [info;non] concat in-kernel) and pad out-rows to the sublane tile.
    def _fold_squeeze(w, col0, ncols, rows_pad):
        ext = jnp.zeros((w.shape[0], C), f32).at[:, col0:col0 + ncols].set(w)
        swp = jnp.concatenate([ext[:, h:], ext[:, :h]], axis=1)

        def _pad(m):
            return jnp.zeros((rows_pad, C), f32).at[:m.shape[0]].set(m)
        return _pad(ext), _pad(swp)

    w_sq1 = params["squeeze1"][:, :, 0, 0].astype(f32)            # (us, up_c)
    w_sq2 = params["squeeze2"][:, :, 0, 0].astype(f32)            # (ls, low_c)
    w_up_i, w_up_n = _fold_squeeze(w_sq1, 0, up_c, us_pad)        # (us_pad, C) x2
    w_low_i, w_low_n = _fold_squeeze(w_sq2, up_c, low_c, ls_pad)  # (ls_pad, C) x2

    # GWC: densify grouped weight, per-tap (C, us) slices, fold PWC1 into the
    # centre tap, zero-pad each tap block to us_pad cols, stack along K.
    in_pg, out_pg = up_s_c // groups, C // groups
    dense = jnp.zeros((C, up_s_c, gks, gks), f32)
    for g in range(groups):
        dense = dense.at[g * out_pg:(g + 1) * out_pg,
                         g * in_pg:(g + 1) * in_pg].set(
            params["gwc_w"][g * out_pg:(g + 1) * out_pg].astype(f32))
    w_pwc1 = params["pwc1"][:, :, 0, 0].astype(f32)               # (C, us)
    center = (gks * gks) // 2
    blocks = []
    for k in range(gks * gks):
        blk = dense[:, :, k // gks, k % gks]
        if k == center:
            blk = blk + w_pwc1
        blocks.append(jnp.zeros((C, us_pad), f32).at[:, :up_s_c].set(blk))
    w_gwc = jnp.concatenate(blocks, axis=1)                       # (C, 9*us_pad)
    b_gwc = params["gwc_b"].reshape(C, 1).astype(f32)

    # Y2 = cat([PWC2(low_s), low_s]) as one stacked [PWC2 ; I] weight.
    w_pwc2 = params["pwc2"][:, :, 0, 0].astype(f32)               # (C-ls, ls)
    w_y2 = jnp.zeros((C, ls_pad), f32)
    w_y2 = w_y2.at[:C - low_s_c, :low_s_c].set(w_pwc2)
    w_y2 = w_y2.at[C - low_s_c:, :low_s_c].set(jnp.eye(low_s_c, dtype=f32))

    # MXU operand dtype (accumulation is always f32 in-kernel).
    w_up_i, w_up_n = w_up_i.astype(MXU_DTYPE), w_up_n.astype(MXU_DTYPE)
    w_low_i, w_low_n = w_low_i.astype(MXU_DTYPE), w_low_n.astype(MXU_DTYPE)
    w_gwc = w_gwc.astype(MXU_DTYPE)
    w_y2 = w_y2.astype(MXU_DTYPE)

    # pixel (row, col) indices so the kernel builds tap border masks without
    # vector integer div/mod.
    rows = jnp.repeat(jnp.arange(H, dtype=jnp.int32), W)
    cols = jnp.tile(jnp.arange(W, dtype=jnp.int32), H)
    pix = jnp.stack([rows, cols], axis=0)                         # (2, HW)

    x_flat = x.reshape(B, C, HW)        # pure reshape: no transpose, no im2col

    kernel = functools.partial(_scconv_kernel, H=H, W=W, gks=gks,
                               gn_eps=gn_eps, gate=gate_threshold, us_pad=us_pad)

    weights = (pix, grp, sg_w, sg_b, w_up_i, w_up_n, w_low_i, w_low_n,
               w_gwc, b_gwc, w_y2)
    mm_flops = 2 * B * HW * C * (2 * us_pad + 2 * ls_pad
                                 + gks * gks * us_pad + ls_pad)
    flops = int(mm_flops + 14 * B * C * HW)
    weight_bytes = int(sum(int(w.size) * w.dtype.itemsize for w in weights))
    bytes_accessed = int(2 * B * C * HW * 4 + weight_bytes)

    out_flat = pl.pallas_call(
        kernel,
        out_shape=jax.ShapeDtypeStruct((B, C, HW), x.dtype),
        grid=(B,),
        in_specs=[
            pl.BlockSpec((None, C, HW), lambda b: (b, 0, 0)),         # x
            pl.BlockSpec((2, HW), lambda b: (0, 0)),                  # pix
            pl.BlockSpec((C, C), lambda b: (0, 0)),                   # grp
            pl.BlockSpec((C, 1), lambda b: (0, 0)),                   # sg_w
            pl.BlockSpec((C, 1), lambda b: (0, 0)),                   # sg_b
            pl.BlockSpec((us_pad, C), lambda b: (0, 0)),              # w_up_i
            pl.BlockSpec((us_pad, C), lambda b: (0, 0)),              # w_up_n
            pl.BlockSpec((ls_pad, C), lambda b: (0, 0)),              # w_low_i
            pl.BlockSpec((ls_pad, C), lambda b: (0, 0)),              # w_low_n
            pl.BlockSpec((C, gks * gks * us_pad), lambda b: (0, 0)),  # w_gwc
            pl.BlockSpec((C, 1), lambda b: (0, 0)),                   # b_gwc
            pl.BlockSpec((C, ls_pad), lambda b: (0, 0)),              # w_y2
        ],
        out_specs=pl.BlockSpec((None, C, HW), lambda b: (b, 0, 0)),
        scratch_shapes=[pltpu.VMEM((gks * gks * us_pad, HW), MXU_DTYPE)],
        compiler_params=pltpu.CompilerParams(
            dimension_semantics=("parallel",),
            vmem_limit_bytes=_pick_vmem_limit_bytes()),
        cost_estimate=pl.CostEstimate(flops=flops,
                                      transcendentals=int(B * C * HW),
                                      bytes_accessed=bytes_accessed),
    )(x_flat, *weights)

    return out_flat.reshape(B, C, H, W)


def scconv_reference(x, params, *, spatial_group_num=4, gate_threshold=0.5,
                     alpha=0.5, squeeze_radio=2, groups=2, group_kernel_size=3,
                     gn_eps=1e-5):
    """Pure-JAX NCHW reference mirroring the PyTorch module exactly."""
    B, C, H, W = x.shape
    # ---- SR unit ----
    xg = x.reshape(B, spatial_group_num, -1)
    mean = xg.mean(axis=2, keepdims=True)
    var = xg.var(axis=2, keepdims=True)                    # biased (torch GN)
    gn = ((xg - mean) / jnp.sqrt(var + gn_eps)).reshape(B, C, H, W)
    gn = gn * params["gn_w"][None, :, None, None] + params["gn_b"][None, :, None, None]
    w_gamma = (params["gn_w"] / jnp.sum(params["gn_w"]))[None, :, None, None]
    rw = jax.nn.sigmoid(gn * w_gamma)
    info = jnp.where(rw > gate_threshold, 1.0, rw)
    non = jnp.where(rw > gate_threshold, 0.0, rw)
    x1, x2 = info * x, non * x
    hh = C // 2
    xs = jnp.concatenate([x1[:, :hh] + x2[:, hh:], x1[:, hh:] + x2[:, :hh]], axis=1)

    # ---- CR unit ----
    up_c = int(alpha * C)
    gks = group_kernel_size

    def conv(inp, w, g=1, p=0):
        return jax.lax.conv_general_dilated(
            inp, w, window_strides=(1, 1), padding=[(p, p), (p, p)],
            feature_group_count=g,
            dimension_numbers=("NCHW", "OIHW", "NCHW"))

    up, low = xs[:, :up_c], xs[:, up_c:]
    up_s = conv(up, params["squeeze1"])
    low_s = conv(low, params["squeeze2"])
    y1 = (conv(up_s, params["gwc_w"], g=groups, p=gks // 2)
          + params["gwc_b"][None, :, None, None]
          + conv(up_s, params["pwc1"]))
    y2 = jnp.concatenate([conv(low_s, params["pwc2"]), low_s], axis=1)
    out = jnp.concatenate([y1, y2], axis=1)
    pooled = jnp.mean(out, axis=(2, 3), keepdims=True)
    out = jax.nn.softmax(pooled, axis=1) * out
    half = out.shape[1] // 2
    return out[:, :half] + out[:, half:]


if __name__ == "__main__":
    # channels=8 -> up=4, low=4, up_s=2, low_s=2, GN groups=4, GWC groups=2.
    B, C, H, W = 2, 8, 16, 16
    key = jax.random.PRNGKey(0)
    kx, kp = jax.random.split(key)
    x = jax.random.normal(kx, (B, C, H, W), jnp.float32)
    params = init_params(kp, C)

    out = jax.block_until_ready(scconv_forward(x, params))

    ref = scconv_reference(x, params)
    assert out.shape == ref.shape == (B, C, H, W)
    # bf16 MXU operands (f32 accumulation) -> loosened parity tolerance.
    tol = 1e-3 if jnp.dtype(MXU_DTYPE) == jnp.dtype(jnp.float32) else 2e-2
    max_err = float(jnp.max(jnp.abs(out - ref)))
    if max_err > tol:
        raise AssertionError(f"kernel/reference mismatch, max_err={max_err}")
    print("KERNEL_OK")
</pallas_src>

<mosaic_0001>
module attributes {stable_mosaic.version = 11 : i64} {
  func.func @_scconv_kernel(%arg0: i32, %arg1: memref<1x8x256xf32, #tpu.memory_space<vmem>>, %arg2: memref<2x256xi32, #tpu.memory_space<vmem>>, %arg3: memref<8x8xf32, #tpu.memory_space<vmem>>, %arg4: memref<8x1xf32, #tpu.memory_space<vmem>>, %arg5: memref<8x1xf32, #tpu.memory_space<vmem>>, %arg6: memref<16x8xbf16, #tpu.memory_space<vmem>>, %arg7: memref<16x8xbf16, #tpu.memory_space<vmem>>, %arg8: memref<16x8xbf16, #tpu.memory_space<vmem>>, %arg9: memref<16x8xbf16, #tpu.memory_space<vmem>>, %arg10: memref<8x144xbf16, #tpu.memory_space<vmem>>, %arg11: memref<8x1xf32, #tpu.memory_space<vmem>>, %arg12: memref<8x16xbf16, #tpu.memory_space<vmem>>, %arg13: memref<1x8x256xf32, #tpu.memory_space<vmem>>, %arg14: memref<144x256xbf16, #tpu.memory_space<vmem>>) attributes {dimension_semantics = [#tpu.dimension_semantics<parallel>], iteration_bounds = array<i64: 2>, scalar_prefetch = 0 : i64, scratch_operands = 1 : i64, tpu.core_type = #tpu.core_type<tc>, window_params = [{transform_indices = @transform_0, window_bounds = array<i64: 1, 8, 256>}, {pipeline_mode = #tpu.pipeline_mode<synchronous>, transform_indices = @transform_1, window_bounds = array<i64: 2, 256>}, {pipeline_mode = #tpu.pipeline_mode<synchronous>, transform_indices = @transform_2, window_bounds = array<i64: 8, 8>}, {pipeline_mode = #tpu.pipeline_mode<synchronous>, transform_indices = @transform_3, window_bounds = array<i64: 8, 1>}, {pipeline_mode = #tpu.pipeline_mode<synchronous>, transform_indices = @transform_4, window_bounds = array<i64: 8, 1>}, {pipeline_mode = #tpu.pipeline_mode<synchronous>, transform_indices = @transform_5, window_bounds = array<i64: 16, 8>}, {pipeline_mode = #tpu.pipeline_mode<synchronous>, transform_indices = @transform_6, window_bounds = array<i64: 16, 8>}, {pipeline_mode = #tpu.pipeline_mode<synchronous>, transform_indices = @transform_7, window_bounds = array<i64: 16, 8>}, {pipeline_mode = #tpu.pipeline_mode<synchronous>, transform_indices = @transform_8, window_bounds = array<i64: 16, 8>}, {pipeline_mode = #tpu.pipeline_mode<synchronous>, transform_indices = @transform_9, window_bounds = array<i64: 8, 144>}, {pipeline_mode = #tpu.pipeline_mode<synchronous>, transform_indices = @transform_10, window_bounds = array<i64: 8, 1>}, {pipeline_mode = #tpu.pipeline_mode<synchronous>, transform_indices = @transform_11, window_bounds = array<i64: 8, 16>}, {transform_indices = @transform_12, window_bounds = array<i64: 1, 8, 256>}]} {
    %c0 = arith.constant 0 : index
    %c0_0 = arith.constant 0 : index
    %c0_1 = arith.constant 0 : index
    %0 = vector.load %arg1[%c0, %c0_0, %c0_1] : memref<1x8x256xf32, #tpu.memory_space<vmem>>, vector<1x8x256xf32>
    %1 = vector.shape_cast %0 : vector<1x8x256xf32> to vector<8x256xf32>
    %cst = arith.constant dense<0.000000e+00> : vector<8xf32>
    %2 = vector.multi_reduction <add>, %1, %cst [1] : vector<8x256xf32> to vector<8xf32>
    %3 = vector.shape_cast %2 : vector<8xf32> to vector<8x1xf32>
    %4 = arith.mulf %1, %1 : vector<8x256xf32>
    %cst_2 = arith.constant dense<0.000000e+00> : vector<8xf32>
    %5 = vector.multi_reduction <add>, %4, %cst_2 [1] : vector<8x256xf32> to vector<8xf32>
    %6 = vector.shape_cast %5 : vector<8xf32> to vector<8x1xf32>
    %c0_3 = arith.constant 0 : index
    %c0_4 = arith.constant 0 : index
    %7 = vector.load %arg3[%c0_3, %c0_4] : memref<8x8xf32, #tpu.memory_space<vmem>>, vector<8x8xf32>
    %8 = tpu.concatenate %3, %6 in 1 : vector<8x1xf32>, vector<8x1xf32> -> vector<8x2xf32>
    %cst_5 = arith.constant dense<0.000000e+00> : vector<8x2xf32>
    %9 = tpu.matmul %7, %8, %cst_5 {dimension_numbers = #tpu.dot_dimension_numbers<[1], [0], [0], [1], [0, 0, 1, 1], [], []>} : vector<8x8xf32>, vector<8x2xf32>, vector<8x2xf32> -> vector<8x2xf32>
    %10 = vector.extract_strided_slice %9 {offsets = [0, 0], sizes = [8, 1], strides = [1, 1]} : vector<8x2xf32> to vector<8x1xf32>
    %11 = vector.extract_strided_slice %9 {offsets = [0, 1], sizes = [8, 1], strides = [1, 1]} : vector<8x2xf32> to vector<8x1xf32>
    %12 = arith.mulf %10, %10 : vector<8x1xf32>
    %13 = arith.subf %11, %12 : vector<8x1xf32>
    %cst_6 = arith.constant 9.99999974E-6 : f32
    %14 = vector.broadcast %cst_6 : f32 to vector<8x1xf32>
    %15 = arith.addf %13, %14 : vector<8x1xf32>
    %16 = math.rsqrt %15 : vector<8x1xf32>
    %c0_7 = arith.constant 0 : index
    %c0_8 = arith.constant 0 : index
    %17 = vector.load %arg4[%c0_7, %c0_8] : memref<8x1xf32, #tpu.memory_space<vmem>>, vector<8x1xf32>
    %18 = arith.mulf %16, %17 : vector<8x1xf32>
    %c0_9 = arith.constant 0 : index
    %c0_10 = arith.constant 0 : index
    %19 = vector.load %arg5[%c0_9, %c0_10] : memref<8x1xf32, #tpu.memory_space<vmem>>, vector<8x1xf32>
    %20 = arith.mulf %10, %18 : vector<8x1xf32>
    %21 = arith.subf %19, %20 : vector<8x1xf32>
    %22 = vector.broadcast %18 : vector<8x1xf32> to vector<8x256xf32>
    %23 = arith.mulf %1, %22 : vector<8x256xf32>
    %24 = vector.broadcast %21 : vector<8x1xf32> to vector<8x256xf32>
    %25 = arith.addf %23, %24 : vector<8x256xf32>
    %cst_11 = arith.constant 0.000000e+00 : f32
    %26 = vector.broadcast %cst_11 : f32 to vector<8x256xf32>
    %27 = arith.subf %26, %25 : vector<8x256xf32>
    %28 = math.exp %27 : vector<8x256xf32>
    %cst_12 = arith.constant 1.000000e+00 : f32
    %29 = vector.broadcast %cst_12 : f32 to vector<8x256xf32>
    %30 = arith.addf %29, %28 : vector<8x256xf32>
    %cst_13 = arith.constant 1.000000e+00 : f32
    %31 = vector.broadcast %cst_13 : f32 to vector<8x256xf32>
    %32 = arith.divf %31, %30 : vector<8x256xf32>
    %cst_14 = arith.constant 5.000000e-01 : f32
    %33 = vector.broadcast %cst_14 : f32 to vector<8x256xf32>
    %34 = arith.cmpf ogt, %32, %33 : vector<8x256xf32>
    %35 = arith.mulf %32, %1 : vector<8x256xf32>
    %36 = arith.select %34, %1, %35 : vector<8x256xi1>, vector<8x256xf32>
    %cst_15 = arith.constant 0.000000e+00 : f32
    %37 = vector.broadcast %cst_15 : f32 to vector<8x256xf32>
    %38 = arith.select %34, %37, %35 : vector<8x256xi1>, vector<8x256xf32>
    %39 = arith.truncf %36 : vector<8x256xf32> to vector<8x256xbf16>
    %40 = arith.truncf %38 : vector<8x256xf32> to vector<8x256xbf16>
    %c0_16 = arith.constant 0 : index
    %c0_17 = arith.constant 0 : index
    %41 = vector.load %arg6[%c0_16, %c0_17] : memref<16x8xbf16, #tpu.memory_space<vmem>>, vector<16x8xbf16>
    %cst_18 = arith.constant dense<0.000000e+00> : vector<16x256xf32>
    %42 = tpu.matmul %41, %39, %cst_18 {dimension_numbers = #tpu.dot_dimension_numbers<[1], [0], [0], [1], [0, 0, 1, 1], [], []>} : vector<16x8xbf16>, vector<8x256xbf16>, vector<16x256xf32> -> vector<16x256xf32>
    %c0_19 = arith.constant 0 : index
    %c0_20 = arith.constant 0 : index
    %43 = vector.load %arg7[%c0_19, %c0_20] : memref<16x8xbf16, #tpu.memory_space<vmem>>, vector<16x8xbf16>
    %cst_21 = arith.constant dense<0.000000e+00> : vector<16x256xf32>
    %44 = tpu.matmul %43, %40, %cst_21 {dimension_numbers = #tpu.dot_dimension_numbers<[1], [0], [0], [1], [0, 0, 1, 1], [], []>} : vector<16x8xbf16>, vector<8x256xbf16>, vector<16x256xf32> -> vector<16x256xf32>
    %45 = arith.addf %42, %44 : vector<16x256xf32>
    %c0_22 = arith.constant 0 : index
    %c0_23 = arith.constant 0 : index
    %46 = vector.load %arg8[%c0_22, %c0_23] : memref<16x8xbf16, #tpu.memory_space<vmem>>, vector<16x8xbf16>
    %cst_24 = arith.constant dense<0.000000e+00> : vector<16x256xf32>
    %47 = tpu.matmul %46, %39, %cst_24 {dimension_numbers = #tpu.dot_dimension_numbers<[1], [0], [0], [1], [0, 0, 1, 1], [], []>} : vector<16x8xbf16>, vector<8x256xbf16>, vector<16x256xf32> -> vector<16x256xf32>
    %c0_25 = arith.constant 0 : index
    %c0_26 = arith.constant 0 : index
    %48 = vector.load %arg9[%c0_25, %c0_26] : memref<16x8xbf16, #tpu.memory_space<vmem>>, vector<16x8xbf16>
    %cst_27 = arith.constant dense<0.000000e+00> : vector<16x256xf32>
    %49 = tpu.matmul %48, %40, %cst_27 {dimension_numbers = #tpu.dot_dimension_numbers<[1], [0], [0], [1], [0, 0, 1, 1], [], []>} : vector<16x8xbf16>, vector<8x256xbf16>, vector<16x256xf32> -> vector<16x256xf32>
    %50 = arith.addf %47, %49 : vector<16x256xf32>
    %c0_28 = arith.constant 0 : index
    %c0_29 = arith.constant 0 : index
    %51 = vector.load %arg2[%c0_28, %c0_29] : memref<2x256xi32, #tpu.memory_space<vmem>>, vector<1x256xi32>
    %c1 = arith.constant 1 : index
    %c0_30 = arith.constant 0 : index
    %52 = vector.load %arg2[%c1, %c0_30] : memref<2x256xi32, #tpu.memory_space<vmem>>, vector<1x256xi32>
    %c17_i32 = arith.constant 17 : i32
    %53 = tpu.dynamic_rotate %45 by %c17_i32 dim 1 : vector<16x256xf32>, i32 -> vector<16x256xf32>
    %c1_i32 = arith.constant 1 : i32
    %54 = vector.broadcast %c1_i32 : i32 to vector<1x256xi32>
    %55 = arith.cmpi sge, %51, %54 : vector<1x256xi32>
    %c17_i32_31 = arith.constant 17 : i32
    %56 = vector.broadcast %c17_i32_31 : i32 to vector<1x256xi32>
    %57 = arith.cmpi slt, %51, %56 : vector<1x256xi32>
    %58 = arith.andi %55, %57 : vector<1x256xi1>
    %c1_i32_32 = arith.constant 1 : i32
    %59 = vector.broadcast %c1_i32_32 : i32 to vector<1x256xi32>
    %60 = arith.cmpi sge, %52, %59 : vector<1x256xi32>
    %61 = arith.andi %58, %60 : vector<1x256xi1>
    %c17_i32_33 = arith.constant 17 : i32
    %62 = vector.broadcast %c17_i32_33 : i32 to vector<1x256xi32>
    %63 = arith.cmpi slt, %52, %62 : vector<1x256xi32>
    %64 = arith.andi %61, %63 : vector<1x256xi1>
    %cst_34 = arith.constant 0.000000e+00 : f32
    %65 = vector.shape_cast %64 : vector<1x256xi1> to vector<1x256xi1>
    %66 = vector.broadcast %65 : vector<1x256xi1> to vector<16x256xi1>
    %67 = vector.broadcast %cst_34 : f32 to vector<16x256xf32>
    %68 = arith.select %66, %53, %67 : vector<16x256xi1>, vector<16x256xf32>
    %69 = arith.truncf %68 : vector<16x256xf32> to vector<16x256xbf16>
    %c0_35 = arith.constant 0 : index
    %c0_36 = arith.constant 0 : index
    %70 = vector.load %arg14[%c0_35, %c0_36] : memref<144x256xbf16, #tpu.memory_space<vmem>>, vector<16x256xbf16>
    tpu.vector_store %arg14[%c0_35, %c0_36], %69 {strides = array<i32>} : memref<144x256xbf16, #tpu.memory_space<vmem>>, vector<16x256xbf16>,
    %c16_i32 = arith.constant 16 : i32
    %71 = tpu.dynamic_rotate %45 by %c16_i32 dim 1 : vector<16x256xf32>, i32 -> vector<16x256xf32>
    %c1_i32_37 = arith.constant 1 : i32
    %72 = vector.broadcast %c1_i32_37 : i32 to vector<1x256xi32>
    %73 = arith.cmpi sge, %51, %72 : vector<1x256xi32>
    %c17_i32_38 = arith.constant 17 : i32
    %74 = vector.broadcast %c17_i32_38 : i32 to vector<1x256xi32>
    %75 = arith.cmpi slt, %51, %74 : vector<1x256xi32>
    %76 = arith.andi %73, %75 : vector<1x256xi1>
    %c0_i32 = arith.constant 0 : i32
    %77 = vector.broadcast %c0_i32 : i32 to vector<1x256xi32>
    %78 = arith.cmpi sge, %52, %77 : vector<1x256xi32>
    %79 = arith.andi %76, %78 : vector<1x256xi1>
    %c16_i32_39 = arith.constant 16 : i32
    %80 = vector.broadcast %c16_i32_39 : i32 to vector<1x256xi32>
    %81 = arith.cmpi slt, %52, %80 : vector<1x256xi32>
    %82 = arith.andi %79, %81 : vector<1x256xi1>
    %cst_40 = arith.constant 0.000000e+00 : f32
    %83 = vector.shape_cast %82 : vector<1x256xi1> to vector<1x256xi1>
    %84 = vector.broadcast %83 : vector<1x256xi1> to vector<16x256xi1>
    %85 = vector.broadcast %cst_40 : f32 to vector<16x256xf32>
    %86 = arith.select %84, %71, %85 : vector<16x256xi1>, vector<16x256xf32>
    %87 = arith.truncf %86 : vector<16x256xf32> to vector<16x256xbf16>
    %c16 = arith.constant 16 : index
    %c0_41 = arith.constant 0 : index
    %88 = vector.load %arg14[%c16, %c0_41] : memref<144x256xbf16, #tpu.memory_space<vmem>>, vector<16x256xbf16>
    tpu.vector_store %arg14[%c16, %c0_41], %87 {strides = array<i32>} : memref<144x256xbf16, #tpu.memory_space<vmem>>, vector<16x256xbf16>,
    %c15_i32 = arith.constant 15 : i32
    %89 = tpu.dynamic_rotate %45 by %c15_i32 dim 1 : vector<16x256xf32>, i32 -> vector<16x256xf32>
    %c1_i32_42 = arith.constant 1 : i32
    %90 = vector.broadcast %c1_i32_42 : i32 to vector<1x256xi32>
    %91 = arith.cmpi sge, %51, %90 : vector<1x256xi32>
    %c17_i32_43 = arith.constant 17 : i32
    %92 = vector.broadcast %c17_i32_43 : i32 to vector<1x256xi32>
    %93 = arith.cmpi slt, %51, %92 : vector<1x256xi32>
    %94 = arith.andi %91, %93 : vector<1x256xi1>
    %c-1_i32 = arith.constant -1 : i32
    %95 = vector.broadcast %c-1_i32 : i32 to vector<1x256xi32>
    %96 = arith.cmpi sge, %52, %95 : vector<1x256xi32>
    %97 = arith.andi %94, %96 : vector<1x256xi1>
    %c15_i32_44 = arith.constant 15 : i32
    %98 = vector.broadcast %c15_i32_44 : i32 to vector<1x256xi32>
    %99 = arith.cmpi slt, %52, %98 : vector<1x256xi32>
    %100 = arith.andi %97, %99 : vector<1x256xi1>
    %cst_45 = arith.constant 0.000000e+00 : f32
    %101 = vector.shape_cast %100 : vector<1x256xi1> to vector<1x256xi1>
    %102 = vector.broadcast %101 : vector<1x256xi1> to vector<16x256xi1>
    %103 = vector.broadcast %cst_45 : f32 to vector<16x256xf32>
    %104 = arith.select %102, %89, %103 : vector<16x256xi1>, vector<16x256xf32>
    %105 = arith.truncf %104 : vector<16x256xf32> to vector<16x256xbf16>
    %c32 = arith.constant 32 : index
    %c0_46 = arith.constant 0 : index
    %106 = vector.load %arg14[%c32, %c0_46] : memref<144x256xbf16, #tpu.memory_space<vmem>>, vector<16x256xbf16>
    tpu.vector_store %arg14[%c32, %c0_46], %105 {strides = array<i32>} : memref<144x256xbf16, #tpu.memory_space<vmem>>, vector<16x256xbf16>,
    %c1_i32_47 = arith.constant 1 : i32
    %107 = tpu.dynamic_rotate %45 by %c1_i32_47 dim 1 : vector<16x256xf32>, i32 -> vector<16x256xf32>
    %c0_i32_48 = arith.constant 0 : i32
    %108 = vector.broadcast %c0_i32_48 : i32 to vector<1x256xi32>
    %109 = arith.cmpi sge, %51, %108 : vector<1x256xi32>
    %c16_i32_49 = arith.constant 16 : i32
    %110 = vector.broadcast %c16_i32_49 : i32 to vector<1x256xi32>
    %111 = arith.cmpi slt, %51, %110 : vector<1x256xi32>
    %112 = arith.andi %109, %111 : vector<1x256xi1>
    %c1_i32_50 = arith.constant 1 : i32
    %113 = vector.broadcast %c1_i32_50 : i32 to vector<1x256xi32>
    %114 = arith.cmpi sge, %52, %113 : vector<1x256xi32>
    %115 = arith.andi %112, %114 : vector<1x256xi1>
    %c17_i32_51 = arith.constant 17 : i32
    %116 = vector.broadcast %c17_i32_51 : i32 to vector<1x256xi32>
    %117 = arith.cmpi slt, %52, %116 : vector<1x256xi32>
    %118 = arith.andi %115, %117 : vector<1x256xi1>
    %cst_52 = arith.constant 0.000000e+00 : f32
    %119 = vector.shape_cast %118 : vector<1x256xi1> to vector<1x256xi1>
    %120 = vector.broadcast %119 : vector<1x256xi1> to vector<16x256xi1>
    %121 = vector.broadcast %cst_52 : f32 to vector<16x256xf32>
    %122 = arith.select %120, %107, %121 : vector<16x256xi1>, vector<16x256xf32>
    %123 = arith.truncf %122 : vector<16x256xf32> to vector<16x256xbf16>
    %c48 = arith.constant 48 : index
    %c0_53 = arith.constant 0 : index
    %124 = vector.load %arg14[%c48, %c0_53] : memref<144x256xbf16, #tpu.memory_space<vmem>>, vector<16x256xbf16>
    tpu.vector_store %arg14[%c48, %c0_53], %123 {strides = array<i32>} : memref<144x256xbf16, #tpu.memory_space<vmem>>, vector<16x256xbf16>,
    %c0_i32_54 = arith.constant 0 : i32
    %125 = vector.broadcast %c0_i32_54 : i32 to vector<1x256xi32>
    %126 = arith.cmpi sge, %51, %125 : vector<1x256xi32>
    %c16_i32_55 = arith.constant 16 : i32
    %127 = vector.broadcast %c16_i32_55 : i32 to vector<1x256xi32>
    %128 = arith.cmpi slt, %51, %127 : vector<1x256xi32>
    %129 = arith.andi %126, %128 : vector<1x256xi1>
    %c0_i32_56 = arith.constant 0 : i32
    %130 = vector.broadcast %c0_i32_56 : i32 to vector<1x256xi32>
    %131 = arith.cmpi sge, %52, %130 : vector<1x256xi32>
    %132 = arith.andi %129, %131 : vector<1x256xi1>
    %c16_i32_57 = arith.constant 16 : i32
    %133 = vector.broadcast %c16_i32_57 : i32 to vector<1x256xi32>
    %134 = arith.cmpi slt, %52, %133 : vector<1x256xi32>
    %135 = arith.andi %132, %134 : vector<1x256xi1>
    %cst_58 = arith.constant 0.000000e+00 : f32
    %136 = vector.shape_cast %135 : vector<1x256xi1> to vector<1x256xi1>
    %137 = vector.broadcast %136 : vector<1x256xi1> to vector<16x256xi1>
    %138 = vector.broadcast %cst_58 : f32 to vector<16x256xf32>
    %139 = arith.select %137, %45, %138 : vector<16x256xi1>, vector<16x256xf32>
    %140 = arith.truncf %139 : vector<16x256xf32> to vector<16x256xbf16>
    %c64 = arith.constant 64 : index
    %c0_59 = arith.constant 0 : index
    %141 = vector.load %arg14[%c64, %c0_59] : memref<144x256xbf16, #tpu.memory_space<vmem>>, vector<16x256xbf16>
    tpu.vector_store %arg14[%c64, %c0_59], %140 {strides = array<i32>} : memref<144x256xbf16, #tpu.memory_space<vmem>>, vector<16x256xbf16>,
    %c255_i32 = arith.constant 255 : i32
    %142 = tpu.dynamic_rotate %45 by %c255_i32 dim 1 : vector<16x256xf32>, i32 -> vector<16x256xf32>
    %c0_i32_60 = arith.constant 0 : i32
    %143 = vector.broadcast %c0_i32_60 : i32 to vector<1x256xi32>
    %144 = arith.cmpi sge, %51, %143 : vector<1x256xi32>
    %c16_i32_61 = arith.constant 16 : i32
    %145 = vector.broadcast %c16_i32_61 : i32 to vector<1x256xi32>
    %146 = arith.cmpi slt, %51, %145 : vector<1x256xi32>
    %147 = arith.andi %144, %146 : vector<1x256xi1>
    %c-1_i32_62 = arith.constant -1 : i32
    %148 = vector.broadcast %c-1_i32_62 : i32 to vector<1x256xi32>
    %149 = arith.cmpi sge, %52, %148 : vector<1x256xi32>
    %150 = arith.andi %147, %149 : vector<1x256xi1>
    %c15_i32_63 = arith.constant 15 : i32
    %151 = vector.broadcast %c15_i32_63 : i32 to vector<1x256xi32>
    %152 = arith.cmpi slt, %52, %151 : vector<1x256xi32>
    %153 = arith.andi %150, %152 : vector<1x256xi1>
    %cst_64 = arith.constant 0.000000e+00 : f32
    %154 = vector.shape_cast %153 : vector<1x256xi1> to vector<1x256xi1>
    %155 = vector.broadcast %154 : vector<1x256xi1> to vector<16x256xi1>
    %156 = vector.broadcast %cst_64 : f32 to vector<16x256xf32>
    %157 = arith.select %155, %142, %156 : vector<16x256xi1>, vector<16x256xf32>
    %158 = arith.truncf %157 : vector<16x256xf32> to vector<16x256xbf16>
    %c80 = arith.constant 80 : index
    %c0_65 = arith.constant 0 : index
    %159 = vector.load %arg14[%c80, %c0_65] : memref<144x256xbf16, #tpu.memory_space<vmem>>, vector<16x256xbf16>
    tpu.vector_store %arg14[%c80, %c0_65], %158 {strides = array<i32>} : memref<144x256xbf16, #tpu.memory_space<vmem>>, vector<16x256xbf16>,
    %c241_i32 = arith.constant 241 : i32
    %160 = tpu.dynamic_rotate %45 by %c241_i32 dim 1 : vector<16x256xf32>, i32 -> vector<16x256xf32>
    %c-1_i32_66 = arith.constant -1 : i32
    %161 = vector.broadcast %c-1_i32_66 : i32 to vector<1x256xi32>
    %162 = arith.cmpi sge, %51, %161 : vector<1x256xi32>
    %c15_i32_67 = arith.constant 15 : i32
    %163 = vector.broadcast %c15_i32_67 : i32 to vector<1x256xi32>
    %164 = arith.cmpi slt, %51, %163 : vector<1x256xi32>
    %165 = arith.andi %162, %164 : vector<1x256xi1>
    %c1_i32_68 = arith.constant 1 : i32
    %166 = vector.broadcast %c1_i32_68 : i32 to vector<1x256xi32>
    %167 = arith.cmpi sge, %52, %166 : vector<1x256xi32>
    %168 = arith.andi %165, %167 : vector<1x256xi1>
    %c17_i32_69 = arith.constant 17 : i32
    %169 = vector.broadcast %c17_i32_69 : i32 to vector<1x256xi32>
    %170 = arith.cmpi slt, %52, %169 : vector<1x256xi32>
    %171 = arith.andi %168, %170 : vector<1x256xi1>
    %cst_70 = arith.constant 0.000000e+00 : f32
    %172 = vector.shape_cast %171 : vector<1x256xi1> to vector<1x256xi1>
    %173 = vector.broadcast %172 : vector<1x256xi1> to vector<16x256xi1>
    %174 = vector.broadcast %cst_70 : f32 to vector<16x256xf32>
    %175 = arith.select %173, %160, %174 : vector<16x256xi1>, vector<16x256xf32>
    %176 = arith.truncf %175 : vector<16x256xf32> to vector<16x256xbf16>
    %c96 = arith.constant 96 : index
    %c0_71 = arith.constant 0 : index
    %177 = vector.load %arg14[%c96, %c0_71] : memref<144x256xbf16, #tpu.memory_space<vmem>>, vector<16x256xbf16>
    tpu.vector_store %arg14[%c96, %c0_71], %176 {strides = array<i32>} : memref<144x256xbf16, #tpu.memory_space<vmem>>, vector<16x256xbf16>,
    %c240_i32 = arith.constant 240 : i32
    %178 = tpu.dynamic_rotate %45 by %c240_i32 dim 1 : vector<16x256xf32>, i32 -> vector<16x256xf32>
    %c-1_i32_72 = arith.constant -1 : i32
    %179 = vector.broadcast %c-1_i32_72 : i32 to vector<1x256xi32>
    %180 = arith.cmpi sge, %51, %179 : vector<1x256xi32>
    %c15_i32_73 = arith.constant 15 : i32
    %181 = vector.broadcast %c15_i32_73 : i32 to vector<1x256xi32>
    %182 = arith.cmpi slt, %51, %181 : vector<1x256xi32>
    %183 = arith.andi %180, %182 : vector<1x256xi1>
    %c0_i32_74 = arith.constant 0 : i32
    %184 = vector.broadcast %c0_i32_74 : i32 to vector<1x256xi32>
    %185 = arith.cmpi sge, %52, %184 : vector<1x256xi32>
    %186 = arith.andi %183, %185 : vector<1x256xi1>
    %c16_i32_75 = arith.constant 16 : i32
    %187 = vector.broadcast %c16_i32_75 : i32 to vector<1x256xi32>
    %188 = arith.cmpi slt, %52, %187 : vector<1x256xi32>
    %189 = arith.andi %186, %188 : vector<1x256xi1>
    %cst_76 = arith.constant 0.000000e+00 : f32
    %190 = vector.shape_cast %189 : vector<1x256xi1> to vector<1x256xi1>
    %191 = vector.broadcast %190 : vector<1x256xi1> to vector<16x256xi1>
    %192 = vector.broadcast %cst_76 : f32 to vector<16x256xf32>
    %193 = arith.select %191, %178, %192 : vector<16x256xi1>, vector<16x256xf32>
    %194 = arith.truncf %193 : vector<16x256xf32> to vector<16x256xbf16>
    %c112 = arith.constant 112 : index
    %c0_77 = arith.constant 0 : index
    %195 = vector.load %arg14[%c112, %c0_77] : memref<144x256xbf16, #tpu.memory_space<vmem>>, vector<16x256xbf16>
    tpu.vector_store %arg14[%c112, %c0_77], %194 {strides = array<i32>} : memref<144x256xbf16, #tpu.memory_space<vmem>>, vector<16x256xbf16>,
    %c239_i32 = arith.constant 239 : i32
    %196 = tpu.dynamic_rotate %45 by %c239_i32 dim 1 : vector<16x256xf32>, i32 -> vector<16x256xf32>
    %c-1_i32_78 = arith.constant -1 : i32
    %197 = vector.broadcast %c-1_i32_78 : i32 to vector<1x256xi32>
    %198 = arith.cmpi sge, %51, %197 : vector<1x256xi32>
    %c15_i32_79 = arith.constant 15 : i32
    %199 = vector.broadcast %c15_i32_79 : i32 to vector<1x256xi32>
    %200 = arith.cmpi slt, %51, %199 : vector<1x256xi32>
    %201 = arith.andi %198, %200 : vector<1x256xi1>
    %c-1_i32_80 = arith.constant -1 : i32
    %202 = vector.broadcast %c-1_i32_80 : i32 to vector<1x256xi32>
    %203 = arith.cmpi sge, %52, %202 : vector<1x256xi32>
    %204 = arith.andi %201, %203 : vector<1x256xi1>
    %c15_i32_81 = arith.constant 15 : i32
    %205 = vector.broadcast %c15_i32_81 : i32 to vector<1x256xi32>
    %206 = arith.cmpi slt, %52, %205 : vector<1x256xi32>
    %207 = arith.andi %204, %206 : vector<1x256xi1>
    %cst_82 = arith.constant 0.000000e+00 : f32
    %208 = vector.shape_cast %207 : vector<1x256xi1> to vector<1x256xi1>
    %209 = vector.broadcast %208 : vector<1x256xi1> to vector<16x256xi1>
    %210 = vector.broadcast %cst_82 : f32 to vector<16x256xf32>
    %211 = arith.select %209, %196, %210 : vector<16x256xi1>, vector<16x256xf32>
    %212 = arith.truncf %211 : vector<16x256xf32> to vector<16x256xbf16>
    %c128 = arith.constant 128 : index
    %c0_83 = arith.constant 0 : index
    %213 = vector.load %arg14[%c128, %c0_83] : memref<144x256xbf16, #tpu.memory_space<vmem>>, vector<16x256xbf16>
    tpu.vector_store %arg14[%c128, %c0_83], %212 {strides = array<i32>} : memref<144x256xbf16, #tpu.memory_space<vmem>>, vector<16x256xbf16>,
    %c0_84 = arith.constant 0 : index
    %c0_85 = arith.constant 0 : index
    %214 = vector.load %arg10[%c0_84, %c0_85] : memref<8x144xbf16, #tpu.memory_space<vmem>>, vector<8x144xbf16>
    %c0_86 = arith.constant 0 : index
    %c0_87 = arith.constant 0 : index
    %215 = vector.load %arg14[%c0_86, %c0_87] : memref<144x256xbf16, #tpu.memory_space<vmem>>, vector<144x256xbf16>
    %cst_88 = arith.constant dense<0.000000e+00> : vector<8x256xf32>
    %216 = tpu.matmul %214, %215, %cst_88 {dimension_numbers = #tpu.dot_dimension_numbers<[1], [0], [0], [1], [0, 0, 1, 1], [], []>} : vector<8x144xbf16>, vector<144x256xbf16>, vector<8x256xf32> -> vector<8x256xf32>
    %c0_89 = arith.constant 0 : index
    %c0_90 = arith.constant 0 : index
    %217 = vector.load %arg11[%c0_89, %c0_90] : memref<8x1xf32, #tpu.memory_space<vmem>>, vector<8x1xf32>
    %218 = vector.broadcast %217 : vector<8x1xf32> to vector<8x256xf32>
    %219 = arith.addf %216, %218 : vector<8x256xf32>
    %c0_91 = arith.constant 0 : index
    %c0_92 = arith.constant 0 : index
    %220 = vector.load %arg12[%c0_91, %c0_92] : memref<8x16xbf16, #tpu.memory_space<vmem>>, vector<8x16xbf16>
    %221 = arith.truncf %50 : vector<16x256xf32> to vector<16x256xbf16>
    %cst_93 = arith.constant dense<0.000000e+00> : vector<8x256xf32>
    %222 = tpu.matmul %220, %221, %cst_93 {dimension_numbers = #tpu.dot_dimension_numbers<[1], [0], [0], [1], [0, 0, 1, 1], [], []>} : vector<8x16xbf16>, vector<16x256xbf16>, vector<8x256xf32> -> vector<8x256xf32>
    %cst_94 = arith.constant dense<0.000000e+00> : vector<8xf32>
    %223 = vector.multi_reduction <add>, %219, %cst_94 [1] : vector<8x256xf32> to vector<8xf32>
    %224 = vector.shape_cast %223 : vector<8xf32> to vector<8x1xf32>
    %cst_95 = arith.constant 3.906250e-03 : f32
    %225 = vector.broadcast %cst_95 : f32 to vector<8x1xf32>
    %226 = arith.mulf %224, %225 : vector<8x1xf32>
    %cst_96 = arith.constant dense<0.000000e+00> : vector<8xf32>
    %227 = vector.multi_reduction <add>, %222, %cst_96 [1] : vector<8x256xf32> to vector<8xf32>
    %228 = vector.shape_cast %227 : vector<8xf32> to vector<8x1xf32>
    %cst_97 = arith.constant 3.906250e-03 : f32
    %229 = vector.broadcast %cst_97 : f32 to vector<8x1xf32>
    %230 = arith.mulf %228, %229 : vector<8x1xf32>
    %231 = vector.shape_cast %226 : vector<8x1xf32> to vector<1x8x1xf32>
    %cst_98 = arith.constant dense<0xFF800000> : vector<1xf32>
    %232 = vector.multi_reduction <maximumf>, %231, %cst_98 [1, 2] : vector<1x8x1xf32> to vector<1xf32>
    %233 = vector.shape_cast %232 : vector<1xf32> to vector<1x1x1xf32>
    %234 = vector.extract %233[0, 0, 0] : f32 from vector<1x1x1xf32>
    %235 = vector.broadcast %234 : f32 to vector<1x1xf32>
    %236 = vector.shape_cast %230 : vector<8x1xf32> to vector<1x8x1xf32>
    %cst_99 = arith.constant dense<0xFF800000> : vector<1xf32>
    %237 = vector.multi_reduction <maximumf>, %236, %cst_99 [1, 2] : vector<1x8x1xf32> to vector<1xf32>
    %238 = vector.shape_cast %237 : vector<1xf32> to vector<1x1x1xf32>
    %239 = vector.extract %238[0, 0, 0] : f32 from vector<1x1x1xf32>
    %240 = vector.broadcast %239 : f32 to vector<1x1xf32>
    %241 = arith.maximumf %235, %240 : vector<1x1xf32>
    %242 = vector.broadcast %241 : vector<1x1xf32> to vector<8x1xf32>
    %243 = arith.subf %226, %242 : vector<8x1xf32>
    %244 = math.exp %243 : vector<8x1xf32>
    %245 = vector.broadcast %241 : vector<1x1xf32> to vector<8x1xf32>
    %246 = arith.subf %230, %245 : vector<8x1xf32>
    %247 = math.exp %246 : vector<8x1xf32>
    %248 = vector.shape_cast %244 : vector<8x1xf32> to vector<1x8x1xf32>
    %cst_100 = arith.constant dense<0.000000e+00> : vector<1xf32>
    %249 = vector.multi_reduction <add>, %248, %cst_100 [1, 2] : vector<1x8x1xf32> to vector<1xf32>
    %250 = vector.shape_cast %249 : vector<1xf32> to vector<1x1x1xf32>
    %251 = vector.extract %250[0, 0, 0] : f32 from vector<1x1x1xf32>
    %252 = vector.broadcast %251 : f32 to vector<1x1xf32>
    %253 = vector.shape_cast %247 : vector<8x1xf32> to vector<1x8x1xf32>
    %cst_101 = arith.constant dense<0.000000e+00> : vector<1xf32>
    %254 = vector.multi_reduction <add>, %253, %cst_101 [1, 2] : vector<1x8x1xf32> to vector<1xf32>
    %255 = vector.shape_cast %254 : vector<1xf32> to vector<1x1x1xf32>
    %256 = vector.extract %255[0, 0, 0] : f32 from vector<1x1x1xf32>
    %257 = vector.broadcast %256 : f32 to vector<1x1xf32>
    %258 = arith.addf %252, %257 : vector<1x1xf32>
    %cst_102 = arith.constant 1.000000e+00 : f32
    %259 = vector.broadcast %cst_102 : f32 to vector<1x1xf32>
    %260 = arith.divf %259, %258 : vector<1x1xf32>
    %261 = vector.broadcast %260 : vector<1x1xf32> to vector<8x1xf32>
    %262 = arith.mulf %244, %261 : vector<8x1xf32>
    %263 = vector.broadcast %262 : vector<8x1xf32> to vector<8x256xf32>
    %264 = arith.mulf %219, %263 : vector<8x256xf32>
    %265 = vector.broadcast %260 : vector<1x1xf32> to vector<8x1xf32>
    %266 = arith.mulf %247, %265 : vector<8x1xf32>
    %267 = vector.broadcast %266 : vector<8x1xf32> to vector<8x256xf32>
    %268 = arith.mulf %222, %267 : vector<8x256xf32>
    %269 = arith.addf %264, %268 : vector<8x256xf32>
    %c0_103 = arith.constant 0 : index
    %c0_104 = arith.constant 0 : index
    %c0_105 = arith.constant 0 : index
    %270 = vector.load %arg13[%c0_103, %c0_104, %c0_105] : memref<1x8x256xf32, #tpu.memory_space<vmem>>, vector<1x8x256xf32>
    %271 = vector.shape_cast %270 : vector<1x8x256xf32> to vector<8x256xf32>
    %272 = vector.shape_cast %269 : vector<8x256xf32> to vector<1x8x256xf32>
    tpu.vector_store %arg13[%c0_103, %c0_104, %c0_105], %272 {strides = array<i32>} : memref<1x8x256xf32, #tpu.memory_space<vmem>>, vector<1x8x256xf32>,
    return
  }
  func.func @transform_0(%arg0: i32) -> (i32, i32, i32) {
    %c0_i32 = arith.constant 0 : i32
    %c0_i32_0 = arith.constant 0 : i32
    %c0_i32_1 = arith.constant 0 : i32
    return %arg0, %c0_i32, %c0_i32_0 : i32, i32, i32
  }
  func.func @transform_1(%arg0: i32) -> (i32, i32) {
    %c0_i32 = arith.constant 0 : i32
    %c0_i32_0 = arith.constant 0 : i32
    %c0_i32_1 = arith.constant 0 : i32
    return %c0_i32, %c0_i32_0 : i32, i32
  }
  func.func @transform_2(%arg0: i32) -> (i32, i32) {
    %c0_i32 = arith.constant 0 : i32
    %c0_i32_0 = arith.constant 0 : i32
    %c0_i32_1 = arith.constant 0 : i32
    return %c0_i32, %c0_i32_0 : i32, i32
  }
  func.func @transform_3(%arg0: i32) -> (i32, i32) {
    %c0_i32 = arith.constant 0 : i32
    %c0_i32_0 = arith.constant 0 : i32
    %c0_i32_1 = arith.constant 0 : i32
    return %c0_i32, %c0_i32_0 : i32, i32
  }
  func.func @transform_4(%arg0: i32) -> (i32, i32) {
    %c0_i32 = arith.constant 0 : i32
    %c0_i32_0 = arith.constant 0 : i32
    %c0_i32_1 = arith.constant 0 : i32
    return %c0_i32, %c0_i32_0 : i32, i32
  }
  func.func @transform_5(%arg0: i32) -> (i32, i32) {
    %c0_i32 = arith.constant 0 : i32
    %c0_i32_0 = arith.constant 0 : i32
    %c0_i32_1 = arith.constant 0 : i32
    return %c0_i32, %c0_i32_0 : i32, i32
  }
  func.func @transform_6(%arg0: i32) -> (i32, i32) {
    %c0_i32 = arith.constant 0 : i32
    %c0_i32_0 = arith.constant 0 : i32
    %c0_i32_1 = arith.constant 0 : i32
    return %c0_i32, %c0_i32_0 : i32, i32
  }
  func.func @transform_7(%arg0: i32) -> (i32, i32) {
    %c0_i32 = arith.constant 0 : i32
    %c0_i32_0 = arith.constant 0 : i32
    %c0_i32_1 = arith.constant 0 : i32
    return %c0_i32, %c0_i32_0 : i32, i32
  }
  func.func @transform_8(%arg0: i32) -> (i32, i32) {
    %c0_i32 = arith.constant 0 : i32
    %c0_i32_0 = arith.constant 0 : i32
    %c0_i32_1 = arith.constant 0 : i32
    return %c0_i32, %c0_i32_0 : i32, i32
  }
  func.func @transform_9(%arg0: i32) -> (i32, i32) {
    %c0_i32 = arith.constant 0 : i32
    %c0_i32_0 = arith.constant 0 : i32
    %c0_i32_1 = arith.constant 0 : i32
    return %c0_i32, %c0_i32_0 : i32, i32
  }
  func.func @transform_10(%arg0: i32) -> (i32, i32) {
    %c0_i32 = arith.constant 0 : i32
    %c0_i32_0 = arith.constant 0 : i32
    %c0_i32_1 = arith.constant 0 : i32
    return %c0_i32, %c0_i32_0 : i32, i32
  }
  func.func @transform_11(%arg0: i32) -> (i32, i32) {
    %c0_i32 = arith.constant 0 : i32
    %c0_i32_0 = arith.constant 0 : i32
    %c0_i32_1 = arith.constant 0 : i32
    return %c0_i32, %c0_i32_0 : i32, i32
  }
  func.func @transform_12(%arg0: i32) -> (i32, i32, i32) {
    %c0_i32 = arith.constant 0 : i32
    %c0_i32_0 = arith.constant 0 : i32
    %c0_i32_1 = arith.constant 0 : i32
    return %arg0, %c0_i32, %c0_i32_0 : i32, i32, i32
  }
}

</mosaic_0001>

<llo_original>
// kernel: tpu_custom_call.1
$region0: #{tpu_custom_call.1}
  #allocation0 [shape = 'u32[]', space=smem, size = 0x4, offset = 0x4, fixed_abs, tag = 'smem constant byte address 0x4 - core index']
  #allocation1 [shape = 'u32[144,128]{1,0:T(1,128)}', space=vmem, size = 0x12000, scoped, tag = 'internal scratch']
  #allocation2 [shape = 'bf16[144,256]{1,0:T(16,128)(2,1)}', space=vmem, size = 0x12000, scoped, tag = 'scratch operand']
  %s0 = inlined_call_operand.vmem [shape: f32[2,8,256], index: 0, kind: input, shape index: {}]
  %s1 = inlined_call_operand.vmem [shape: s32[2,256], index: 1, kind: input, shape index: {}]
  %s2 = inlined_call_operand.vmem [shape: f32[8,8], index: 2, kind: input, shape index: {}]
  %s3 = inlined_call_operand.vmem [shape: f32[8,1], index: 3, kind: input, shape index: {}]
  %s4 = inlined_call_operand.vmem [shape: f32[8,1], index: 4, kind: input, shape index: {}]
  %s5 = inlined_call_operand.vmem [shape: bf16[16,8], index: 5, kind: input, shape index: {}]
  %s6 = inlined_call_operand.vmem [shape: bf16[16,8], index: 6, kind: input, shape index: {}]
  %s7 = inlined_call_operand.vmem [shape: bf16[16,8], index: 7, kind: input, shape index: {}]
  %s8 = inlined_call_operand.vmem [shape: bf16[16,8], index: 8, kind: input, shape index: {}]
  %s9 = inlined_call_operand.vmem [shape: bf16[8,144], index: 9, kind: input, shape index: {}]
  %s10 = inlined_call_operand.vmem [shape: f32[8,1], index: 10, kind: input, shape index: {}]
  %s11 = inlined_call_operand.vmem [shape: bf16[8,16], index: 11, kind: input, shape index: {}]
  %s12 = inlined_call_operand.hbm [shape: f32[2,8,256], index: 12, kind: output, shape index: {}]
  %s13 = sld [smem:[#allocation0]]
  $region81: #{tpu_custom_call.1} parent=0
    _
  %s15 = ssub.s32 1, %s13
  %s16 = scalar_select 0, %s15, %s13
  $region1: #{tpu_custom_call.1} parent=0
    #allocation3 [shape = 'u8[16384]{0}', space=vmem, size = 0x4000, scoped, tag = 'output window, operand 0']
    #allocation4 [shape = 's32[2]{0}', space=sflag, size = 0x8, scoped, tag = 'scoped memory for tpu_custom_call.1']
    %17 = vsyncpa [#allocation4], 0
    %s18 = scalar_lea.sflag [#allocation4], 1
    %19 = vsyncpa %s18, 0
    loop: start=0, step=1, limit=4
    $region2: #{tpu_custom_call.1} parent=1 // loop_pre_header
      _
    $region3: #{tpu_custom_call.1} parent=1 // loop_header
      %s21 = sphi 0, %s25
      %p22 = scmp.ge.s32.totalorder %s21, 4
      %s31 = sphi 0, %s33
      %s34 = sphi 0, %s31
      %s35 = sphi 0, %s34
      %s51 = sphi 0, %s35
      %s55 = sphi 0, %s55
      %s57 = sphi 0, %s55
      %s58 = sphi 0, %s57
      %s72 = sphi 0, %s58
      %s76 = sphi 0, %s76
      %s78 = sphi 0, %s76
      %s79 = sphi 0, %s78
      %s93 = sphi 0, %s79
      %s97 = sphi 0, %s97
      %s99 = sphi 0, %s97
      %s100 = sphi 0, %s99
      %s114 = sphi 0, %s100
      %s118 = sphi 0, %s118
      %s120 = sphi 0, %s118
      %s121 = sphi 0, %s120
      %s135 = sphi 0, %s121
      %s139 = sphi 0, %s139
      %s141 = sphi 0, %s139
      %s142 = sphi 0, %s141
      %s156 = sphi 0, %s142
      %s160 = sphi 0, %s160
      %s162 = sphi 0, %s160
      %s163 = sphi 0, %s162
      %s177 = sphi 0, %s163
      %s181 = sphi 0, %s181
      %s183 = sphi 0, %s181
      %s184 = sphi 0, %s183
      %s198 = sphi 0, %s184
      %s202 = sphi 0, %s202
      %s204 = sphi 0, %s202
      %s205 = sphi 0, %s204
      %s219 = sphi 0, %s205
      %s223 = sphi 0, %s223
      %s225 = sphi 0, %s223
      %s226 = sphi 0, %s225
      %s240 = sphi 0, %s226
      %s244 = sphi 0, %s244
      %s246 = sphi 0, %s244
      %s247 = sphi 0, %s246
      %s261 = sphi 0, %s247
      %s265 = sphi 0, %s265
      %s267 = sphi 0, %s265
      %s268 = sphi 0, %s267
      %s282 = sphi 0, %s268
      %s288 = sphi 0, %s290
      %s291 = sphi 0, %s288
      %s292 = sphi 0, %s291
      %s308 = sphi 0, %s292
    $region4: #{tpu_custom_call.1} parent=1 // loop_header_branch
      %24 = sbr.rel (%p22) target = $region8
    $region5: #{tpu_custom_call.1} parent=1 // loop_body
      %s26 = ssub.s32 %s21, 1
      %s27 = ssub.s32 %s21, 2
      %s28 = sadd.s32 %s21, 1
      %s29 = ssub.s32 %s21, %s28
      %p30 = scmp.eq.s32.totalorder %s29, 0
      %s32 = sadd.s32 %s31, 1
      %s33 = scalar_select %p30, %s31, %s32
      %p36 = pneg %p30
      %p37 = scmp.eq.s32.totalorder %s21, 1
      %p38 = por %p36, %p37
      %p39 = scmp.ne.s32.totalorder %s31, %s34
      %p40 = scmp.eq.s32.totalorder %s21, 0
      %p41 = por %p39, %p40
      %p42 = scmp.ne.s32.totalorder %s31, %s34
      %p43 = scmp.eq.s32.totalorder %s26, 1
      %p44 = por %p42, %p43
      %p45 = scmp.ne.s32.totalorder %s34, %s35
      %p46 = scmp.eq.s32.totalorder %s26, 0
      %p47 = por %p45, %p46
      %p48 = scmp.ne.s32.totalorder %s34, %s35
      %p49 = scmp.eq.s32.totalorder %s27, 1
      %p50 = por %p48, %p49
      %p52 = scmp.ne.s32.totalorder %s35, %s51
      %p53 = scmp.eq.s32.totalorder %s27, 0
      %p54 = por %p52, %p53
      %s56 = sadd.s32 %s55, 1
      %p59 = scmp.eq.s32.totalorder %s21, 1
      %p60 = scmp.ne.s32.totalorder %s55, %s57
      %p61 = scmp.eq.s32.totalorder %s21, 0
      %p62 = por %p60, %p61
      %p63 = scmp.ne.s32.totalorder %s55, %s57
      %p64 = scmp.eq.s32.totalorder %s26, 1
      %p65 = por %p63, %p64
      %p66 = scmp.ne.s32.totalorder %s57, %s58
      %p67 = scmp.eq.s32.totalorder %s26, 0
      %p68 = por %p66, %p67
      %p69 = scmp.ne.s32.totalorder %s57, %s58
      %p70 = scmp.eq.s32.totalorder %s27, 1
      %p71 = por %p69, %p70
      %p73 = scmp.ne.s32.totalorder %s58, %s72
      %p74 = scmp.eq.s32.totalorder %s27, 0
      %p75 = por %p73, %p74
      %s77 = sadd.s32 %s76, 1
      %p80 = scmp.eq.s32.totalorder %s21, 1
      %p81 = scmp.ne.s32.totalorder %s76, %s78
      %p82 = scmp.eq.s32.totalorder %s21, 0
      %p83 = por %p81, %p82
      %p84 = scmp.ne.s32.totalorder %s76, %s78
      %p85 = scmp.eq.s32.totalorder %s26, 1
      %p86 = por %p84, %p85
      %p87 = scmp.ne.s32.totalorder %s78, %s79
      %p88 = scmp.eq.s32.totalorder %s26, 0
      %p89 = por %p87, %p88
      %p90 = scmp.ne.s32.totalorder %s78, %s79
      %p91 = scmp.eq.s32.totalorder %s27, 1
      %p92 = por %p90, %p91
      %p94 = scmp.ne.s32.totalorder %s79, %s93
      %p95 = scmp.eq.s32.totalorder %s27, 0
      %p96 = por %p94, %p95
      %s98 = sadd.s32 %s97, 1
      %p101 = scmp.eq.s32.totalorder %s21, 1
      %p102 = scmp.ne.s32.totalorder %s97, %s99
      %p103 = scmp.eq.s32.totalorder %s21, 0
      %p104 = por %p102, %p103
      %p105 = scmp.ne.s32.totalorder %s97, %s99
      %p106 = scmp.eq.s32.totalorder %s26, 1
      %p107 = por %p105, %p106
      %p108 = scmp.ne.s32.totalorder %s99, %s100
      %p109 = scmp.eq.s32.totalorder %s26, 0
      %p110 = por %p108, %p109
      %p111 = scmp.ne.s32.totalorder %s99, %s100
      %p112 = scmp.eq.s32.totalorder %s27, 1
      %p113 = por %p111, %p112
      %p115 = scmp.ne.s32.totalorder %s100, %s114
      %p116 = scmp.eq.s32.totalorder %s27, 0
      %p117 = por %p115, %p116
      %s119 = sadd.s32 %s118, 1
      %p122 = scmp.eq.s32.totalorder %s21, 1
      %p123 = scmp.ne.s32.totalorder %s118, %s120
      %p124 = scmp.eq.s32.totalorder %s21, 0
      %p125 = por %p123, %p124
      %p126 = scmp.ne.s32.totalorder %s118, %s120
      %p127 = scmp.eq.s32.totalorder %s26, 1
      %p128 = por %p126, %p127
      %p129 = scmp.ne.s32.totalorder %s120, %s121
      %p130 = scmp.eq.s32.totalorder %s26, 0
      %p131 = por %p129, %p130
      %p132 = scmp.ne.s32.totalorder %s120, %s121
      %p133 = scmp.eq.s32.totalorder %s27, 1
      %p134 = por %p132, %p133
      %p136 = scmp.ne.s32.totalorder %s121, %s135
      %p137 = scmp.eq.s32.totalorder %s27, 0
      %p138 = por %p136, %p137
      %s140 = sadd.s32 %s139, 1
      %p143 = scmp.eq.s32.totalorder %s21, 1
      %p144 = scmp.ne.s32.totalorder %s139, %s141
      %p145 = scmp.eq.s32.totalorder %s21, 0
      %p146 = por %p144, %p145
      %p147 = scmp.ne.s32.totalorder %s139, %s141
      %p148 = scmp.eq.s32.totalorder %s26, 1
      %p149 = por %p147, %p148
      %p150 = scmp.ne.s32.totalorder %s141, %s142
      %p151 = scmp.eq.s32.totalorder %s26, 0
      %p152 = por %p150, %p151
      %p153 = scmp.ne.s32.totalorder %s141, %s142
      %p154 = scmp.eq.s32.totalorder %s27, 1
      %p155 = por %p153, %p154
      %p157 = scmp.ne.s32.totalorder %s142, %s156
      %p158 = scmp.eq.s32.totalorder %s27, 0
      %p159 = por %p157, %p158
      %s161 = sadd.s32 %s160, 1
      %p164 = scmp.eq.s32.totalorder %s21, 1
      %p165 = scmp.ne.s32.totalorder %s160, %s162
      %p166 = scmp.eq.s32.totalorder %s21, 0
      %p167 = por %p165, %p166
      %p168 = scmp.ne.s32.totalorder %s160, %s162
      %p169 = scmp.eq.s32.totalorder %s26, 1
      %p170 = por %p168, %p169
      %p171 = scmp.ne.s32.totalorder %s162, %s163
      %p172 = scmp.eq.s32.totalorder %s26, 0
      %p173 = por %p171, %p172
      %p174 = scmp.ne.s32.totalorder %s162, %s163
      %p175 = scmp.eq.s32.totalorder %s27, 1
      %p176 = por %p174, %p175
      %p178 = scmp.ne.s32.totalorder %s163, %s177
      %p179 = scmp.eq.s32.totalorder %s27, 0
      %p180 = por %p178, %p179
      %s182 = sadd.s32 %s181, 1
      %p185 = scmp.eq.s32.totalorder %s21, 1
      %p186 = scmp.ne.s32.totalorder %s181, %s183
      %p187 = scmp.eq.s32.totalorder %s21, 0
      %p188 = por %p186, %p187
      %p189 = scmp.ne.s32.totalorder %s181, %s183
      %p190 = scmp.eq.s32.totalorder %s26, 1
      %p191 = por %p189, %p190
      %p192 = scmp.ne.s32.totalorder %s183, %s184
      %p193 = scmp.eq.s32.totalorder %s26, 0
      %p194 = por %p192, %p193
      %p195 = scmp.ne.s32.totalorder %s183, %s184
      %p196 = scmp.eq.s32.totalorder %s27, 1
      %p197 = por %p195, %p196
      %p199 = scmp.ne.s32.totalorder %s184, %s198
      %p200 = scmp.eq.s32.totalorder %s27, 0
      %p201 = por %p199, %p200
      %s203 = sadd.s32 %s202, 1
      %p206 = scmp.eq.s32.totalorder %s21, 1
      %p207 = scmp.ne.s32.totalorder %s202, %s204
      %p208 = scmp.eq.s32.totalorder %s21, 0
      %p209 = por %p207, %p208
      %p210 = scmp.ne.s32.totalorder %s202, %s204
      %p211 = scmp.eq.s32.totalorder %s26, 1
      %p212 = por %p210, %p211
      %p213 = scmp.ne.s32.totalorder %s204, %s205
      %p214 = scmp.eq.s32.totalorder %s26, 0
      %p215 = por %p213, %p214
      %p216 = scmp.ne.s32.totalorder %s204, %s205
      %p217 = scmp.eq.s32.totalorder %s27, 1
      %p218 = por %p216, %p217
      %p220 = scmp.ne.s32.totalorder %s205, %s219
      %p221 = scmp.eq.s32.totalorder %s27, 0
      %p222 = por %p220, %p221
      %s224 = sadd.s32 %s223, 1
      %p227 = scmp.eq.s32.totalorder %s21, 1
      %p228 = scmp.ne.s32.totalorder %s223, %s225
      %p229 = scmp.eq.s32.totalorder %s21, 0
      %p230 = por %p228, %p229
      %p231 = scmp.ne.s32.totalorder %s223, %s225
      %p232 = scmp.eq.s32.totalorder %s26, 1
      %p233 = por %p231, %p232
      %p234 = scmp.ne.s32.totalorder %s225, %s226
      %p235 = scmp.eq.s32.totalorder %s26, 0
      %p236 = por %p234, %p235
      %p237 = scmp.ne.s32.totalorder %s225, %s226
      %p238 = scmp.eq.s32.totalorder %s27, 1
      %p239 = por %p237, %p238
      %p241 = scmp.ne.s32.totalorder %s226, %s240
      %p242 = scmp.eq.s32.totalorder %s27, 0
      %p243 = por %p241, %p242
      %s245 = sadd.s32 %s244, 1
      %p248 = scmp.eq.s32.totalorder %s21, 1
      %p249 = scmp.ne.s32.totalorder %s244, %s246
      %p250 = scmp.eq.s32.totalorder %s21, 0
      %p251 = por %p249, %p250
      %p252 = scmp.ne.s32.totalorder %s244, %s246
      %p253 = scmp.eq.s32.totalorder %s26, 1
      %p254 = por %p252, %p253
      %p255 = scmp.ne.s32.totalorder %s246, %s247
      %p256 = scmp.eq.s32.totalorder %s26, 0
      %p257 = por %p255, %p256
      %p258 = scmp.ne.s32.totalorder %s246, %s247
      %p259 = scmp.eq.s32.totalorder %s27, 1
      %p260 = por %p258, %p259
      %p262 = scmp.ne.s32.totalorder %s247, %s261
      %p263 = scmp.eq.s32.totalorder %s27, 0
      %p264 = por %p262, %p263
      %s266 = sadd.s32 %s265, 1
      %p269 = scmp.eq.s32.totalorder %s21, 1
      %p270 = scmp.ne.s32.totalorder %s265, %s267
      %p271 = scmp.eq.s32.totalorder %s21, 0
      %p272 = por %p270, %p271
      %p273 = scmp.ne.s32.totalorder %s265, %s267
      %p274 = scmp.eq.s32.totalorder %s26, 1
      %p275 = por %p273, %p274
      %p276 = scmp.ne.s32.totalorder %s267, %s268
      %p277 = scmp.eq.s32.totalorder %s26, 0
      %p278 = por %p276, %p277
      %p279 = scmp.ne.s32.totalorder %s267, %s268
      %p280 = scmp.eq.s32.totalorder %s27, 1
      %p281 = por %p279, %p280
      %p283 = scmp.ne.s32.totalorder %s268, %s282
      %p284 = scmp.eq.s32.totalorder %s27, 0
      %p285 = por %p283, %p284
      %s286 = ssub.s32 %s21, %s28
      %p287 = scmp.eq.s32.totalorder %s286, 0
      %s289 = sadd.s32 %s288, 1
      %s290 = scalar_select %p287, %s288, %s289
      %p293 = pneg %p287
      %p294 = scmp.eq.s32.totalorder %s21, 1
      %p295 = por %p293, %p294
      %p296 = scmp.ne.s32.totalorder %s288, %s291
      %p297 = scmp.eq.s32.totalorder %s21, 0
      %p298 = por %p296, %p297
      %p299 = scmp.ne.s32.totalorder %s288, %s291
      %p300 = scmp.eq.s32.totalorder %s26, 1
      %p301 = por %p299, %p300
      %p302 = scmp.ne.s32.totalorder %s291, %s292
      %p303 = scmp.eq.s32.totalorder %s26, 0
      %p304 = por %p302, %p303
      %p305 = scmp.ne.s32.totalorder %s291, %s292
      %p306 = scmp.eq.s32.totalorder %s27, 1
      %p307 = por %p305, %p306
      %p309 = scmp.ne.s32.totalorder %s292, %s308
      %p310 = scmp.eq.s32.totalorder %s27, 0
      %p311 = por %p309, %p310
      %p312 = scmp.le.s32.totalorder 1, %s21
      %p313 = scmp.lt.s32.totalorder %s21, 3
      %p314 = pnand %p312, %p313
      %p315 = pneg %p314
      // Predicated region
      $region9: #{tpu_custom_call.1} parent=5 // pred_check
        _
      $region10: #{tpu_custom_call.1} parent=5 // pred_check_branch
        %317 = sbr.rel (%p314) target = $region12
      $region11: #{tpu_custom_call.1} parent=5 // pred_region
        %s318 = ssub.s32 %s21, 1
        // Predicated region
        $region13: #{tpu_custom_call.1} parent=11 // pred_check
          %p319 = pneg %p68
        $region14: #{tpu_custom_call.1} parent=11 // pred_check_branch
          %321 = sbr.rel (%p319) target = $region16
        $region15: #{tpu_custom_call.1} parent=11 // pred_region
          _
        $region16: #{tpu_custom_call.1} parent=11 // pred_fallthru
          _
        // Predicated region
        $region17: #{tpu_custom_call.1} parent=11 // pred_check
          %p322 = pneg %p89
        $region18: #{tpu_custom_call.1} parent=11 // pred_check_branch
          %324 = sbr.rel (%p322) target = $region20
        $region19: #{tpu_custom_call.1} parent=11 // pred_region
          _
        $region20: #{tpu_custom_call.1} parent=11 // pred_fallthru
          _
        // Predicated region
        $region21: #{tpu_custom_call.1} parent=11 // pred_check
          %p325 = pneg %p110
        $region22: #{tpu_custom_call.1} parent=11 // pred_check_branch
          %327 = sbr.rel (%p325) target = $region24
        $region23: #{tpu_custom_call.1} parent=11 // pred_region
          _
        $region24: #{tpu_custom_call.1} parent=11 // pred_fallthru
          _
        // Predicated region
        $region25: #{tpu_custom_call.1} parent=11 // pred_check
          %p328 = pneg %p131
        $region26: #{tpu_custom_call.1} parent=11 // pred_check_branch
          %330 = sbr.rel (%p328) target = $region28
        $region27: #{tpu_custom_call.1} parent=11 // pred_region
          _
        $region28: #{tpu_custom_call.1} parent=11 // pred_fallthru
          _
        // Predicated region
        $region29: #{tpu_custom_call.1} parent=11 // pred_check
          %p331 = pneg %p152
        $region30: #{tpu_custom_call.1} parent=11 // pred_check_branch
          %333 = sbr.rel (%p331) target = $region32
        $region31: #{tpu_custom_call.1} parent=11 // pred_region
          _
        $region32: #{tpu_custom_call.1} parent=11 // pred_fallthru
          _
        // Predicated region
        $region33: #{tpu_custom_call.1} parent=11 // pred_check
          %p334 = pneg %p173
        $region34: #{tpu_custom_call.1} parent=11 // pred_check_branch
          %336 = sbr.rel (%p334) target = $region36
        $region35: #{tpu_custom_call.1} parent=11 // pred_region
          _
        $region36: #{tpu_custom_call.1} parent=11 // pred_fallthru
          _
        // Predicated region
        $region37: #{tpu_custom_call.1} parent=11 // pred_check
          %p337 = pneg %p194
        $region38: #{tpu_custom_call.1} parent=11 // pred_check_branch
          %339 = sbr.rel (%p337) target = $region40
        $region39: #{tpu_custom_call.1} parent=11 // pred_region
          _
        $region40: #{tpu_custom_call.1} parent=11 // pred_fallthru
          _
        // Predicated region
        $region41: #{tpu_custom_call.1} parent=11 // pred_check
          %p340 = pneg %p215
        $region42: #{tpu_custom_call.1} parent=11 // pred_check_branch
          %342 = sbr.rel (%p340) target = $region44
        $region43: #{tpu_custom_call.1} parent=11 // pred_region
          _
        $region44: #{tpu_custom_call.1} parent=11 // pred_fallthru
          _
        // Predicated region
        $region45: #{tpu_custom_call.1} parent=11 // pred_check
          %p343 = pneg %p236
        $region46: #{tpu_custom_call.1} parent=11 // pred_check_branch
          %345 = sbr.rel (%p343) target = $region48
        $region47: #{tpu_custom_call.1} parent=11 // pred_region
          _
        $region48: #{tpu_custom_call.1} parent=11 // pred_fallthru
          _
        // Predicated region
        $region49: #{tpu_custom_call.1} parent=11 // pred_check
          %p346 = pneg %p257
        $region50: #{tpu_custom_call.1} parent=11 // pred_check_branch
          %348 = sbr.rel (%p346) target = $region52
        $region51: #{tpu_custom_call.1} parent=11 // pred_region
          _
        $region52: #{tpu_custom_call.1} parent=11 // pred_fallthru
          _
        // Predicated region
        $region53: #{tpu_custom_call.1} parent=11 // pred_check
          %p349 = pneg %p278
        $region54: #{tpu_custom_call.1} parent=11 // pred_check_branch
          %351 = sbr.rel (%p349) target = $region56
        $region55: #{tpu_custom_call.1} parent=11 // pred_region
          _
        $region56: #{tpu_custom_call.1} parent=11 // pred_fallthru
          _
      $region12: #{tpu_custom_call.1} parent=5 // pred_fallthru
        _
      %p352 = scmp.lt.s32.totalorder %s21, 2
      // Predicated region
      $region57: #{tpu_custom_call.1} parent=5 // pred_check
        %p353 = pneg %p352
      $region58: #{tpu_custom_call.1} parent=5 // pred_check_branch
        %355 = sbr.rel (%p353) target = $region60
      $region59: #{tpu_custom_call.1} parent=5 // pred_region
        // Predicated region
        $region61: #{tpu_custom_call.1} parent=59 // pred_check
          %p356 = pneg %p41
        $region62: #{tpu_custom_call.1} parent=59 // pred_check_branch
          %358 = sbr.rel (%p356) target = $region64
        $region63: #{tpu_custom_call.1} parent=59 // pred_region
          %p359 = scmp.lt.s32.totalorder %s21, 1
          %s360 = scalar_select %p359, %s21, 1
          %s361 = smul.addr %s360, 2
          %s362 = smul.addr %s361, 8
          %s363 = scalar_lea.vmem %s0, %s362
        $region64: #{tpu_custom_call.1} parent=59 // pred_fallthru
          _
      $region60: #{tpu_custom_call.1} parent=5 // pred_fallthru
        _
      %p364 = scmp.le.s32.totalorder 1, %s21
      %p365 = scmp.lt.s32.totalorder %s21, 3
      %p366 = pnand %p364, %p365
      %p367 = pneg %p366
      // Predicated region
      $region65: #{tpu_custom_call.1} parent=5 // pred_check
        _
      $region66: #{tpu_custom_call.1} parent=5 // pred_check_branch
        %369 = sbr.rel (%p366) target = $region68
      $region67: #{tpu_custom_call.1} parent=5 // pred_region
        %s370 = ssub.s32 %s21, 1
        %p371 = scmp.lt.s32.totalorder %s26, 1
        %s372 = scalar_select %p371, %s26, 1
        %s373 = smul.addr %s372, 2
        %s374 = smul.addr %s373, 8
        %s375 = scalar_lea.vmem %s0, %s374
        %p376 = pneg %p47
        %p377 = pneg %p44
        %p378 = pneg %p68
        %p379 = pneg %p65
        %p380 = pneg %p89
        %p381 = pneg %p86
        %p382 = pneg %p110
        %p383 = pneg %p107
        %p384 = pneg %p131
        %p385 = pneg %p128
        %p386 = pneg %p152
        %p387 = pneg %p149
        %p388 = pneg %p173
        %p389 = pneg %p170
        %p390 = pneg %p194
        %p391 = pneg %p191
        %p392 = pneg %p215
        %p393 = pneg %p212
        %p394 = pneg %p236
        %p395 = pneg %p233
        %p396 = pneg %p257
        %p397 = pneg %p254
        %p398 = pneg %p278
        %p399 = pneg %p275
        %p400 = pneg %p304
        %p401 = pneg %p301
        %s402 = sand.u32 %s291, 1
        %s403 = scalar_lea.sflag [#allocation4], %s402
        %s404 = sand.u32 %s291, 1
        %s405 = smul.addr %s404, 16
        %s406 = scalar_lea.vmem [#allocation3], %s405
        %p407 = scmp.lt.s32.totalorder %s26, 1
        %s408 = scalar_select %p407, %s26, 1
        %s409 = smul.addr %s408, 2
        %s410 = smul.addr %s409, 8
        %s411 = scalar_lea.vmem %s0, %s410
        %v413 = vld [vmem:[%s411] sm:$0xff]
        %v414 = vld [vmem:[%s411 + $0x8] sm:$0xff]
        %v415 = vadd.f32 %v413, %v414
        %416 = vadd.xlane.f32.xlu0 %v415
        %v417 = vpop.xlane.xlu0 %416
        %v418 = vmul.f32 %v413, %v413
        %v419 = vmul.f32 %v414, %v414
        %v420 = vadd.f32 %v418, %v419
        %421 = vadd.xlane.f32.xlu0 %v420
        %v422 = vpop.xlane.xlu0 %421
        %v423 = vld [vmem:[%s2] sm:$0xff]
        %vm424 = vcmask 7168
        %v425 = vsel %vm424, %v417, %v422
        %vm426 = vcmask 64512
        %v428 = vsel %vm426, %v423, 0
        %430 = vmatprep.subr.mxu0 0.0
        %431 = vmatpush1.msra.mxu0 %v425
        %432 = vmatprep.subr.mxu0 0.0
        %433 = vmatpush1.msra.mxu0 0.0
        %434 = vmatprep.subr.mxu0 0.0
        %435 = vmatpush1.msra.mxu0 0.0
        %436 = vmatprep.subr.mxu0 0.0
        %437 = vmatpush1.msra.mxu0 0.0
        %438 = vmatprep.subr.mxu0 0.0
        %439 = vmatpush1.msra.mxu0 0.0
        %440 = vmatprep.subr.mxu0 0.0
        %441 = vmatpush1.msra.mxu0 0.0
        %442 = vmatprep.subr.mxu0 0.0
        %443 = vmatpush1.msra.mxu0 0.0
        %444 = vmatprep.subr.mxu0 0.0
        %445 = vmatpush1.msra.mxu0 0.0
        %446 = vmatprep.subr.mxu0 0.0
        %447 = vmatpush1.msra.mxu0 0.0
        %448 = vmatprep.subr.mxu0 0.0
        %449 = vmatpush1.msra.mxu0 0.0
        %450 = vmatprep.subr.mxu0 0.0
        %451 = vmatpush1.msra.mxu0 0.0
        %452 = vmatprep.subr.mxu0 0.0
        %453 = vmatpush1.msra.mxu0 0.0
        %454 = vmatprep.subr.mxu0 0.0
        %455 = vmatpush1.msra.mxu0 0.0
        %456 = vmatprep.subr.mxu0 0.0
        %457 = vmatpush1.msra.mxu0 0.0
        %458 = vmatprep.subr.mxu0 0.0
        %459 = vmatpush1.msra.mxu0 0.0
        %460 = vmatprep.subr.mxu0 0.0
        %461 = vmatpush1.msra.mxu0 0.0
        %462 = vmatprep.subr.mxu0 0.0
        %463 = vmatpush1.msra.mxu0 0.0
        %464 = vmatprep.subr.mxu0 0.0
        %465 = vmatpush1.msra.mxu0 0.0
        %466 = vmatprep.subr.mxu0 0.0
        %467 = vmatpush1.msra.mxu0 0.0
        %468 = vmatprep.subr.mxu0 0.0
        %469 = vmatpush1.msra.mxu0 0.0
        %470 = vmatprep.subr.mxu0 0.0
        %471 = vmatpush1.msra.mxu0 0.0
        %472 = vmatprep.subr.mxu0 0.0
        %473 = vmatpush1.msra.mxu0 0.0
        %474 = vmatprep.subr.mxu0 0.0
        %475 = vmatpush1.msra.mxu0 0.0
        %476 = vmatprep.subr.mxu0 0.0
        %477 = vmatpush1.msra.mxu0 0.0
        %478 = vmatprep.subr.mxu0 0.0
        %479 = vmatpush1.msra.mxu0 0.0
        %480 = vmatprep.subr.mxu0 0.0
        %481 = vmatpush1.msra.mxu0 0.0
        %482 = vmatprep.subr.mxu0 0.0
        %483 = vmatpush1.msra.mxu0 0.0
        %484 = vmatprep.subr.mxu0 0.0
        %485 = vmatpush1.msra.mxu0 0.0
        %486 = vmatprep.subr.mxu0 0.0
        %487 = vmatpush1.msra.mxu0 0.0
        %488 = vmatprep.subr.mxu0 0.0
        %489 = vmatpush1.msra.mxu0 0.0
        %490 = vmatprep.subr.mxu0 0.0
        %491 = vmatpush1.msra.mxu0 0.0
        %492 = vmatprep.subr.mxu0 0.0
        %493 = vmatpush1.msra.mxu0 0.0
        %494 = vmatprep.mubr.f32.mxu0 0.0
        %495 = vmatmul.mubr.f32.gmra.mrb[0].mxu0 %v428
        %v496 = vpop.f32.mrb[0].mxu0
        %v497 = vadd.f32 0.0, %v496
        %v498 = vpop.f32.mrb[0].mxu0
        %499 = vdwg.mxu0
        %v500 = vmul.f32 %v497, %v497
        %502 = vrot.lane.b32.xlu0 %v500, 1
        %v503 = vpop.permute.xlu0 %502
        %v505 = vsub.f32 %v497, %v503
        %v506 = vadd.f32 %v505, 1e-05
        %v507 = vrsqrt.pop %v506
        %v508 = vld [vmem:[%s3] sm:$0xff]
        %510 = vrot.lane.b32.xlu0 %v508, 1
        %v511 = vpop.permute.xlu0 %510
        %v513 = vmul.f32 %v507, %v511
        %v514 = vld [vmem:[%s4] sm:$0xff]
        %516 = vrot.lane.b32.xlu0 %v513, 127
        %v517 = vpop.permute.xlu0 %516
        %v519 = vmul.f32 %v497, %v517
        %v520 = vsub.f32 %v514, %v519
        %521 = vset.pattern.permute.xlu0 1
        %522 = vperm.xlu0 %521, %v513
        %v523 = vpop.permute.xlu0 %522
        %v525 = vmul.f32 %v413, %v523
        %v526 = vmul.f32 %v414, %v523
        %528 = vset.pattern.permute.xlu0 0
        %529 = vperm.xlu0 %528, %v520
        %v530 = vpop.permute.xlu0 %529
        %v532 = vadd.f32 %v525, %v530
        %v533 = vadd.f32 %v526, %v530
        %v534 = vsub.f32 0.0, %v532
        %v535 = vsub.f32 0.0, %v533
        %v536 = vmul.f32 %v534, 1.442695
        %v537 = vpow.pop %v536
        %v538 = vmul.f32 %v535, 1.442695
        %v539 = vpow.pop %v538
        %v540 = vadd.f32 %v537, 1.0
        %v541 = vadd.f32 %v539, 1.0
        %v542 = vrcp.pop %v540
        %v543 = vmul.f32 1.0, %v542
        %v544 = vrcp.pop %v541
        %v545 = vmul.f32 1.0, %v544
        %vm546 = vcmp.gt.f32.partialorder %v543, 0.5
        %vm547 = vcmp.gt.f32.partialorder %v545, 0.5
        %v548 = vmul.f32 %v543, %v413
        %v549 = vmul.f32 %v545, %v414
        %v550 = vsel %vm546, %v413, %v548
        %v551 = vsel %vm547, %v414, %v549
        %v552 = vsel %vm546, 0.0, %v548
        %v553 = vsel %vm547, 0.0, %v549
        %v554 = vpack.c.bf16 %v550, %v550
        %v555 = vpack.c.bf16 %v551, %v551
        %v556 = vpack.c.bf16 %v552, %v552
        %v557 = vpack.c.bf16 %v553, %v553
        %v558 = vld [vmem:[%s5] sm:$0xf]
        %v559 = vld [vmem:[%s5 + $0x4] sm:$0xf]
        %v560 = vld [vmem:[%s6] sm:$0xf]
        %v561 = vld [vmem:[%s6 + $0x4] sm:$0xf]
        %v564 = vunpack.c.l.b16 %v560
        %v565 = vunpack.c.l.b16 %v561
        %v566 = vpack.c.b16 %v565, %v564
        %v568 = vsel %vm426, %v566, 0
        %vm570 = vcmask 1043456
        %v572 = vsel %vm570, %v556, 0
        %v575 = vsel %vm570, %v557, 0
        %577 = vmatprep.subr.bf16.mxu0 %v575
        %578 = vmatpush1.bf16.msra.mxu0 %v572
        %579 = vmatprep.subr.bf16.mxu0 0
        %580 = vmatpush1.bf16.msra.mxu0 0
        %581 = vmatprep.subr.bf16.mxu0 0
        %582 = vmatpush1.bf16.msra.mxu0 0
        %583 = vmatprep.subr.bf16.mxu0 0
        %584 = vmatpush1.bf16.msra.mxu0 0
        %585 = vmatprep.subr.bf16.mxu0 0
        %586 = vmatpush1.bf16.msra.mxu0 0
        %587 = vmatprep.subr.bf16.mxu0 0
        %588 = vmatpush1.bf16.msra.mxu0 0
        %589 = vmatprep.subr.bf16.mxu0 0
        %590 = vmatpush1.bf16.msra.mxu0 0
        %591 = vmatprep.subr.bf16.mxu0 0
        %592 = vmatpush1.bf16.msra.mxu0 0
        %593 = vmatprep.subr.bf16.mxu0 0
        %594 = vmatpush1.bf16.msra.mxu0 0
        %595 = vmatprep.subr.bf16.mxu0 0
        %596 = vmatpush1.bf16.msra.mxu0 0
        %597 = vmatprep.subr.bf16.mxu0 0
        %598 = vmatpush1.bf16.msra.mxu0 0
        %599 = vmatprep.subr.bf16.mxu0 0
        %600 = vmatpush1.bf16.msra.mxu0 0
        %601 = vmatprep.subr.bf16.mxu0 0
        %602 = vmatpush1.bf16.msra.mxu0 0
        %603 = vmatprep.subr.bf16.mxu0 0
        %604 = vmatpush1.bf16.msra.mxu0 0
        %605 = vmatprep.subr.bf16.mxu0 0
        %606 = vmatpush1.bf16.msra.mxu0 0
        %607 = vmatprep.subr.bf16.mxu0 0
        %608 = vmatpush1.bf16.msra.mxu0 0
        %609 = vmatprep.mubr.bf16.mxu0 0
        %610 = vmatmul.mubr.bf16.gmra.mrb[0].mxu0 %v568
        %v611 = vpop.f32.mrb[0].mxu0
        %v612 = vadd.f32 0.0, %v611
        %v613 = vpop.f32.mrb[0].mxu0
        %v614 = vadd.f32 0.0, %v613
        %v615 = vpop.f32.mrb[0].mxu0
        %v616 = vadd.f32 0.0, %v615
        %v617 = vpop.f32.mrb[0].mxu0
        %v618 = vadd.f32 0.0, %v617
        %619 = vdwg.mxu0
        %v622 = vunpack.c.l.b16 %v558
        %v623 = vunpack.c.l.b16 %v559
        %v624 = vpack.c.b16 %v623, %v622
        %v626 = vsel %vm426, %v624, 0
        %v629 = vsel %vm570, %v554, 0
        %v632 = vsel %vm570, %v555, 0
        %634 = vmatprep.subr.bf16.mxu0 %v632
        %635 = vmatpush1.bf16.msra.mxu0 %v629
        %636 = vmatprep.subr.bf16.mxu0 0
        %637 = vmatpush1.bf16.msra.mxu0 0
        %638 = vmatprep.subr.bf16.mxu0 0
        %639 = vmatpush1.bf16.msra.mxu0 0
        %640 = vmatprep.subr.bf16.mxu0 0
        %641 = vmatpush1.bf16.msra.mxu0 0
        %642 = vmatprep.subr.bf16.mxu0 0
        %643 = vmatpush1.bf16.msra.mxu0 0
        %644 = vmatprep.subr.bf16.mxu0 0
        %645 = vmatpush1.bf16.msra.mxu0 0
        %646 = vmatprep.subr.bf16.mxu0 0
        %647 = vmatpush1.bf16.msra.mxu0 0
        %648 = vmatprep.subr.bf16.mxu0 0
        %649 = vmatpush1.bf16.msra.mxu0 0
        %650 = vmatprep.subr.bf16.mxu0 0
        %651 = vmatpush1.bf16.msra.mxu0 0
        %652 = vmatprep.subr.bf16.mxu0 0
        %653 = vmatpush1.bf16.msra.mxu0 0
        %654 = vmatprep.subr.bf16.mxu0 0
        %655 = vmatpush1.bf16.msra.mxu0 0
        %656 = vmatprep.subr.bf16.mxu0 0
        %657 = vmatpush1.bf16.msra.mxu0 0
        %658 = vmatprep.subr.bf16.mxu0 0
        %659 = vmatpush1.bf16.msra.mxu0 0
        %660 = vmatprep.subr.bf16.mxu0 0
        %661 = vmatpush1.bf16.msra.mxu0 0
        %662 = vmatprep.subr.bf16.mxu0 0
        %663 = vmatpush1.bf16.msra.mxu0 0
        %664 = vmatprep.subr.bf16.mxu0 0
        %665 = vmatpush1.bf16.msra.mxu0 0
        %666 = vmatprep.mubr.bf16.mxu0 0
        %667 = vmatmul.mubr.bf16.gmra.mrb[0].mxu0 %v626
        %v668 = vpop.f32.mrb[0].mxu0
        %v669 = vadd.f32 %v612, %v668
        %v670 = vpop.f32.mrb[0].mxu0
        %v671 = vadd.f32 %v614, %v670
        %v672 = vpop.f32.mrb[0].mxu0
        %v673 = vadd.f32 %v616, %v672
        %v674 = vpop.f32.mrb[0].mxu0
        %v675 = vadd.f32 %v618, %v674
        %676 = vdwg.mxu0
        %v677 = vld [vmem:[%s7] sm:$0xf]
        %v678 = vld [vmem:[%s7 + $0x4] sm:$0xf]
        %v679 = vld [vmem:[%s8] sm:$0xf]
        %v680 = vld [vmem:[%s8 + $0x4] sm:$0xf]
        %v683 = vunpack.c.l.b16 %v679
        %v684 = vunpack.c.l.b16 %v680
        %v685 = vpack.c.b16 %v684, %v683
        %v687 = vsel %vm426, %v685, 0
        %689 = vmatprep.subr.bf16.mxu0 %v575
        %690 = vmatpush1.bf16.msra.mxu0 %v572
        %691 = vmatprep.subr.bf16.mxu0 0
        %692 = vmatpush1.bf16.msra.mxu0 0
        %693 = vmatprep.subr.bf16.mxu0 0
        %694 = vmatpush1.bf16.msra.mxu0 0
        %695 = vmatprep.subr.bf16.mxu0 0
        %696 = vmatpush1.bf16.msra.mxu0 0
        %697 = vmatprep.subr.bf16.mxu0 0
        %698 = vmatpush1.bf16.msra.mxu0 0
        %699 = vmatprep.subr.bf16.mxu0 0
        %700 = vmatpush1.bf16.msra.mxu0 0
        %701 = vmatprep.subr.bf16.mxu0 0
        %702 = vmatpush1.bf16.msra.mxu0 0
        %703 = vmatprep.subr.bf16.mxu0 0
        %704 = vmatpush1.bf16.msra.mxu0 0
        %705 = vmatprep.subr.bf16.mxu0 0
        %706 = vmatpush1.bf16.msra.mxu0 0
        %707 = vmatprep.subr.bf16.mxu0 0
        %708 = vmatpush1.bf16.msra.mxu0 0
        %709 = vmatprep.subr.bf16.mxu0 0
        %710 = vmatpush1.bf16.msra.mxu0 0
        %711 = vmatprep.subr.bf16.mxu0 0
        %712 = vmatpush1.bf16.msra.mxu0 0
        %713 = vmatprep.subr.bf16.mxu0 0
        %714 = vmatpush1.bf16.msra.mxu0 0
        %715 = vmatprep.subr.bf16.mxu0 0
        %716 = vmatpush1.bf16.msra.mxu0 0
        %717 = vmatprep.subr.bf16.mxu0 0
        %718 = vmatpush1.bf16.msra.mxu0 0
        %719 = vmatprep.subr.bf16.mxu0 0
        %720 = vmatpush1.bf16.msra.mxu0 0
        %721 = vmatprep.mubr.bf16.mxu0 0
        %722 = vmatmul.mubr.bf16.gmra.mrb[0].mxu0 %v687
        %v723 = vpop.f32.mrb[0].mxu0
        %v724 = vadd.f32 0.0, %v723
        %v725 = vpop.f32.mrb[0].mxu0
        %v726 = vadd.f32 0.0, %v725
        %v727 = vpop.f32.mrb[0].mxu0
        %v728 = vadd.f32 0.0, %v727
        %v729 = vpop.f32.mrb[0].mxu0
        %v730 = vadd.f32 0.0, %v729
        %731 = vdwg.mxu0
        %v734 = vunpack.c.l.b16 %v677
        %v735 = vunpack.c.l.b16 %v678
        %v736 = vpack.c.b16 %v735, %v734
        %v738 = vsel %vm426, %v736, 0
        %740 = vmatprep.subr.bf16.mxu0 %v632
        %741 = vmatpush1.bf16.msra.mxu0 %v629
        %742 = vmatprep.subr.bf16.mxu0 0
        %743 = vmatpush1.bf16.msra.mxu0 0
        %744 = vmatprep.subr.bf16.mxu0 0
        %745 = vmatpush1.bf16.msra.mxu0 0
        %746 = vmatprep.subr.bf16.mxu0 0
        %747 = vmatpush1.bf16.msra.mxu0 0
        %748 = vmatprep.subr.bf16.mxu0 0
        %749 = vmatpush1.bf16.msra.mxu0 0
        %750 = vmatprep.subr.bf16.mxu0 0
        %751 = vmatpush1.bf16.msra.mxu0 0
        %752 = vmatprep.subr.bf16.mxu0 0
        %753 = vmatpush1.bf16.msra.mxu0 0
        %754 = vmatprep.subr.bf16.mxu0 0
        %755 = vmatpush1.bf16.msra.mxu0 0
        %756 = vmatprep.subr.bf16.mxu0 0
        %757 = vmatpush1.bf16.msra.mxu0 0
        %758 = vmatprep.subr.bf16.mxu0 0
        %759 = vmatpush1.bf16.msra.mxu0 0
        %760 = vmatprep.subr.bf16.mxu0 0
        %761 = vmatpush1.bf16.msra.mxu0 0
        %762 = vmatprep.subr.bf16.mxu0 0
        %763 = vmatpush1.bf16.msra.mxu0 0
        %764 = vmatprep.subr.bf16.mxu0 0
        %765 = vmatpush1.bf16.msra.mxu0 0
        %766 = vmatprep.subr.bf16.mxu0 0
        %767 = vmatpush1.bf16.msra.mxu0 0
        %768 = vmatprep.subr.bf16.mxu0 0
        %769 = vmatpush1.bf16.msra.mxu0 0
        %770 = vmatprep.subr.bf16.mxu0 0
        %771 = vmatpush1.bf16.msra.mxu0 0
        %772 = vmatprep.mubr.bf16.mxu0 0
        %773 = vmatmul.mubr.bf16.gmra.mrb[0].mxu0 %v738
        %v774 = vpop.f32.mrb[0].mxu0
        %v775 = vadd.f32 %v724, %v774
        %v776 = vpop.f32.mrb[0].mxu0
        %v777 = vadd.f32 %v726, %v776
        %v778 = vpop.f32.mrb[0].mxu0
        %v779 = vadd.f32 %v728, %v778
        %v780 = vpop.f32.mrb[0].mxu0
        %v781 = vadd.f32 %v730, %v780
        %782 = vdwg.mxu0
        %v783 = vld [vmem:[%s1] ss:$2 sm:$0x3]
        %s784 = scalar_lea.vmem %s1, 1
        %v785 = vld [vmem:[%s784] ss:$2 sm:$0x3]
        %786 = vrot.lane.b32.xlu0 %v669, 17
        %v787 = vpop.permute.xlu0 %786
        %788 = vrot.lane.b32.xlu0 %v673, 17
        %v789 = vpop.permute.xlu0 %788
        %790 = vrot.lane.b32.xlu0 %v671, 17
        %v791 = vpop.permute.xlu0 %790
        %792 = vrot.lane.b32.xlu0 %v675, 17
        %v793 = vpop.permute.xlu0 %792
        %v794 = vlaneseq
        %v795 = vand.u32 %v794, 127
        %vm796 = vcmp.lt.s32.totalorder %v795, 17
        %v797 = vsel %vm796, %v787, %v791
        %v798 = vsel %vm796, %v789, %v793
        %v799 = vsel %vm796, %v791, %v787
        %v800 = vsel %vm796, %v793, %v789
        %vm801 = vcmp.ge.s32.totalorder %v783, 1
        %vm802 = vcmp.lt.s32.totalorder %v783, 17
        %vm803 = vmand %vm801, %vm802
        %vm804 = vcmp.ge.s32.totalorder %v785, 1
        %vm805 = vmand %vm803, %vm804
        %vm806 = vcmp.lt.s32.totalorder %v785, 17
        %vm807 = vmand %vm805, %vm806
        %v808 = vsel %vm807, 1, 0
        %v809 = vlaneseq
        %v810 = vshrl.u32 %v809, 7
        %v811 = vsub.s32 0, %v810
        %v812 = vrot.slane %v808, %v811
        %v813 = vlaneseq
        %v814 = vshrl.u32 %v813, 7
        %v815 = vsub.s32 1, %v814
        %v816 = vrot.slane %v808, %v815
        %vm817 = vcmp.eq.s32.totalorder %v812, 1
        %vm818 = vcmp.eq.s32.totalorder %v816, 1
        %v819 = vsel %vm817, %v799, 0.0
        %v820 = vsel %vm818, %v797, 0.0
        %v821 = vsel %vm817, %v800, 0.0
        %v822 = vsel %vm818, %v798, 0.0
        %v823 = vpack.c.bf16 %v821, %v819
        %v824 = vpack.c.bf16 %v822, %v820
        %825 = vst [vmem:[#allocation2] sm:$0xff] %v823
        %826 = vst [vmem:[#allocation2 + $0x8] sm:$0xff] %v824
        %827 = vrot.lane.b32.xlu0 %v669, 16
        %v828 = vpop.permute.xlu0 %827
        %829 = vrot.lane.b32.xlu0 %v673, 16
        %v830 = vpop.permute.xlu0 %829
        %831 = vrot.lane.b32.xlu0 %v671, 16
        %v832 = vpop.permute.xlu0 %831
        %833 = vrot.lane.b32.xlu0 %v675, 16
        %v834 = vpop.permute.xlu0 %833
        %vm835 = vcmp.lt.s32.totalorder %v795, 16
        %v836 = vsel %vm835, %v828, %v832
        %v837 = vsel %vm835, %v830, %v834
        %v838 = vsel %vm835, %v832, %v828
        %v839 = vsel %vm835, %v834, %v830
        %vm840 = vcmp.ge.s32.totalorder %v785, 0
        %vm841 = vmand %vm803, %vm840
        %vm842 = vcmp.lt.s32.totalorder %v785, 16
        %vm843 = vmand %vm841, %vm842
        %v844 = vsel %vm843, 1, 0
        %v845 = vlaneseq
        %v846 = vshrl.u32 %v845, 7
        %v847 = vsub.s32 0, %v846
        %v848 = vrot.slane %v844, %v847
        %v849 = vlaneseq
        %v850 = vshrl.u32 %v849, 7
        %v851 = vsub.s32 1, %v850
        %v852 = vrot.slane %v844, %v851
        %vm853 = vcmp.eq.s32.totalorder %v848, 1
        %vm854 = vcmp.eq.s32.totalorder %v852, 1
        %v855 = vsel %vm853, %v838, 0.0
        %v856 = vsel %vm854, %v836, 0.0
        %v857 = vsel %vm853, %v839, 0.0
        %v858 = vsel %vm854, %v837, 0.0
        %v859 = vpack.c.bf16 %v857, %v855
        %v860 = vpack.c.bf16 %v858, %v856
        %861 = vst [vmem:[#allocation2 + $0x10] sm:$0xff] %v859
        %862 = vst [vmem:[#allocation2 + $0x18] sm:$0xff] %v860
        %863 = vrot.lane.b32.xlu0 %v669, 15
        %v864 = vpop.permute.xlu0 %863
        %865 = vrot.lane.b32.xlu0 %v673, 15
        %v866 = vpop.permute.xlu0 %865
        %867 = vrot.lane.b32.xlu0 %v671, 15
        %v868 = vpop.permute.xlu0 %867
        %869 = vrot.lane.b32.xlu0 %v675, 15
        %v870 = vpop.permute.xlu0 %869
        %vm871 = vcmp.lt.s32.totalorder %v795, 15
        %v872 = vsel %vm871, %v864, %v868
        %v873 = vsel %vm871, %v866, %v870
        %v874 = vsel %vm871, %v868, %v864
        %v875 = vsel %vm871, %v870, %v866
        %vm876 = vcmp.ge.s32.totalorder %v785, 4294967295
        %vm877 = vmand %vm803, %vm876
        %vm878 = vcmp.lt.s32.totalorder %v785, 15
        %vm879 = vmand %vm877, %vm878
        %v880 = vsel %vm879, 1, 0
        %v881 = vlaneseq
        %v882 = vshrl.u32 %v881, 7
        %v883 = vsub.s32 0, %v882
        %v884 = vrot.slane %v880, %v883
        %v885 = vlaneseq
        %v886 = vshrl.u32 %v885, 7
        %v887 = vsub.s32 1, %v886
        %v888 = vrot.slane %v880, %v887
        %vm889 = vcmp.eq.s32.totalorder %v884, 1
        %vm890 = vcmp.eq.s32.totalorder %v888, 1
        %v891 = vsel %vm889, %v874, 0.0
        %v892 = vsel %vm890, %v872, 0.0
        %v893 = vsel %vm889, %v875, 0.0
        %v894 = vsel %vm890, %v873, 0.0
        %v895 = vpack.c.bf16 %v893, %v891
        %v896 = vpack.c.bf16 %v894, %v892
        %897 = vst [vmem:[#allocation2 + $0x20] sm:$0xff] %v895
        %898 = vst [vmem:[#allocation2 + $0x28] sm:$0xff] %v896
        %899 = vrot.lane.b32.xlu0 %v669, 1
        %v900 = vpop.permute.xlu0 %899
        %901 = vrot.lane.b32.xlu0 %v673, 1
        %v902 = vpop.permute.xlu0 %901
        %903 = vrot.lane.b32.xlu0 %v671, 1
        %v904 = vpop.permute.xlu0 %903
        %905 = vrot.lane.b32.xlu0 %v675, 1
        %v906 = vpop.permute.xlu0 %905
        %vm907 = vcmp.lt.s32.totalorder %v795, 1
        %v908 = vsel %vm907, %v900, %v904
        %v909 = vsel %vm907, %v902, %v906
        %v910 = vsel %vm907, %v904, %v900
        %v911 = vsel %vm907, %v906, %v902
        %vm912 = vcmp.ge.s32.totalorder %v783, 0
        %vm913 = vcmp.lt.s32.totalorder %v783, 16
        %vm914 = vmand %vm912, %vm913
        %vm915 = vmand %vm914, %vm804
        %vm916 = vmand %vm915, %vm806
        %v917 = vsel %vm916, 1, 0
        %v918 = vlaneseq
        %v919 = vshrl.u32 %v918, 7
        %v920 = vsub.s32 0, %v919
        %v921 = vrot.slane %v917, %v920
        %v922 = vlaneseq
        %v923 = vshrl.u32 %v922, 7
        %v924 = vsub.s32 1, %v923
        %v925 = vrot.slane %v917, %v924
        %vm926 = vcmp.eq.s32.totalorder %v921, 1
        %vm927 = vcmp.eq.s32.totalorder %v925, 1
        %v928 = vsel %vm926, %v910, 0.0
        %v929 = vsel %vm927, %v908, 0.0
        %v930 = vsel %vm926, %v911, 0.0
        %v931 = vsel %vm927, %v909, 0.0
        %v932 = vpack.c.bf16 %v930, %v928
        %v933 = vpack.c.bf16 %v931, %v929
        %934 = vst [vmem:[#allocation2 + $0x30] sm:$0xff] %v932
        %935 = vst [vmem:[#allocation2 + $0x38] sm:$0xff] %v933
        %vm936 = vmand %vm914, %vm840
        %vm937 = vmand %vm936, %vm842
        %v938 = vsel %vm937, 1, 0
        %v939 = vlaneseq
        %v940 = vshrl.u32 %v939, 7
        %v941 = vsub.s32 0, %v940
        %v942 = vrot.slane %v938, %v941
        %v943 = vlaneseq
        %v944 = vshrl.u32 %v943, 7
        %v945 = vsub.s32 1, %v944
        %v946 = vrot.slane %v938, %v945
        %vm947 = vcmp.eq.s32.totalorder %v942, 1
        %vm948 = vcmp.eq.s32.totalorder %v946, 1
        %v949 = vsel %vm947, %v669, 0.0
        %v950 = vsel %vm948, %v671, 0.0
        %v951 = vsel %vm947, %v673, 0.0
        %v952 = vsel %vm948, %v675, 0.0
        %v953 = vpack.c.bf16 %v951, %v949
        %v954 = vpack.c.bf16 %v952, %v950
        %955 = vst [vmem:[#allocation2 + $0x40] sm:$0xff] %v953
        %956 = vst [vmem:[#allocation2 + $0x48] sm:$0xff] %v954
        %957 = vrot.lane.b32.xlu0 %v669, 127
        %v958 = vpop.permute.xlu0 %957
        %959 = vrot.lane.b32.xlu0 %v673, 127
        %v960 = vpop.permute.xlu0 %959
        %961 = vrot.lane.b32.xlu0 %v671, 127
        %v962 = vpop.permute.xlu0 %961
        %963 = vrot.lane.b32.xlu0 %v675, 127
        %v964 = vpop.permute.xlu0 %963
        %vm965 = vcmp.lt.s32.totalorder %v795, 127
        %v966 = vsel %vm965, %v958, %v962
        %v967 = vsel %vm965, %v960, %v964
        %v968 = vsel %vm965, %v962, %v958
        %v969 = vsel %vm965, %v964, %v960
        %vm970 = vmand %vm914, %vm876
        %vm971 = vmand %vm970, %vm878
        %v972 = vsel %vm971, 1, 0
        %v973 = vlaneseq
        %v974 = vshrl.u32 %v973, 7
        %v975 = vsub.s32 0, %v974
        %v976 = vrot.slane %v972, %v975
        %v977 = vlaneseq
        %v978 = vshrl.u32 %v977, 7
        %v979 = vsub.s32 1, %v978
        %v980 = vrot.slane %v972, %v979
        %vm981 = vcmp.eq.s32.totalorder %v976, 1
        %vm982 = vcmp.eq.s32.totalorder %v980, 1
        %v983 = vsel %vm981, %v966, 0.0
        %v984 = vsel %vm982, %v968, 0.0
        %v985 = vsel %vm981, %v967, 0.0
        %v986 = vsel %vm982, %v969, 0.0
        %v987 = vpack.c.bf16 %v985, %v983
        %v988 = vpack.c.bf16 %v986, %v984
        %989 = vst [vmem:[#allocation2 + $0x50] sm:$0xff] %v987
        %990 = vst [vmem:[#allocation2 + $0x58] sm:$0xff] %v988
        %991 = vrot.lane.b32.xlu0 %v669, 113
        %v992 = vpop.permute.xlu0 %991
        %993 = vrot.lane.b32.xlu0 %v673, 113
        %v994 = vpop.permute.xlu0 %993
        %995 = vrot.lane.b32.xlu0 %v671, 113
        %v996 = vpop.permute.xlu0 %995
        %997 = vrot.lane.b32.xlu0 %v675, 113
        %v998 = vpop.permute.xlu0 %997
        %vm999 = vcmp.lt.s32.totalorder %v795, 113
        %v1000 = vsel %vm999, %v992, %v996
        %v1001 = vsel %vm999, %v994, %v998
        %v1002 = vsel %vm999, %v996, %v992
        %v1003 = vsel %vm999, %v998, %v994
        %vm1004 = vcmp.ge.s32.totalorder %v783, 4294967295
        %vm1005 = vcmp.lt.s32.totalorder %v783, 15
        %vm1006 = vmand %vm1004, %vm1005
        %vm1007 = vmand %vm1006, %vm804
        %vm1008 = vmand %vm1007, %vm806
        %v1009 = vsel %vm1008, 1, 0
        %v1010 = vlaneseq
        %v1011 = vshrl.u32 %v1010, 7
        %v1012 = vsub.s32 0, %v1011
        %v1013 = vrot.slane %v1009, %v1012
        %v1014 = vlaneseq
        %v1015 = vshrl.u32 %v1014, 7
        %v1016 = vsub.s32 1, %v1015
        %v1017 = vrot.slane %v1009, %v1016
        %vm1018 = vcmp.eq.s32.totalorder %v1013, 1
        %vm1019 = vcmp.eq.s32.totalorder %v1017, 1
        %v1020 = vsel %vm1018, %v1000, 0.0
        %v1021 = vsel %vm1019, %v1002, 0.0
        %v1022 = vsel %vm1018, %v1001, 0.0
        %v1023 = vsel %vm1019, %v1003, 0.0
        %v1024 = vpack.c.bf16 %v1022, %v1020
        %v1025 = vpack.c.bf16 %v1023, %v1021
        %1026 = vst [vmem:[#allocation2 + $0x60] sm:$0xff] %v1024
        %1027 = vst [vmem:[#allocation2 + $0x68] sm:$0xff] %v1025
        %1028 = vrot.lane.b32.xlu0 %v669, 112
        %v1029 = vpop.permute.xlu0 %1028
        %1030 = vrot.lane.b32.xlu0 %v673, 112
        %v1031 = vpop.permute.xlu0 %1030
        %1032 = vrot.lane.b32.xlu0 %v671, 112
        %v1033 = vpop.permute.xlu0 %1032
        %1034 = vrot.lane.b32.xlu0 %v675, 112
        %v1035 = vpop.permute.xlu0 %1034
        %vm1036 = vcmp.lt.s32.totalorder %v795, 112
        %v1037 = vsel %vm1036, %v1029, %v1033
        %v1038 = vsel %vm1036, %v1031, %v1035
        %v1039 = vsel %vm1036, %v1033, %v1029
        %v1040 = vsel %vm1036, %v1035, %v1031
        %vm1041 = vmand %vm1006, %vm840
        %vm1042 = vmand %vm1041, %vm842
        %v1043 = vsel %vm1042, 1, 0
        %v1044 = vlaneseq
        %v1045 = vshrl.u32 %v1044, 7
        %v1046 = vsub.s32 0, %v1045
        %v1047 = vrot.slane %v1043, %v1046
        %v1048 = vlaneseq
        %v1049 = vshrl.u32 %v1048, 7
        %v1050 = vsub.s32 1, %v1049
        %v1051 = vrot.slane %v1043, %v1050
        %vm1052 = vcmp.eq.s32.totalorder %v1047, 1
        %vm1053 = vcmp.eq.s32.totalorder %v1051, 1
        %v1054 = vsel %vm1052, %v1037, 0.0
        %v1055 = vsel %vm1053, %v1039, 0.0
        %v1056 = vsel %vm1052, %v1038, 0.0
        %v1057 = vsel %vm1053, %v1040, 0.0
        %v1058 = vpack.c.bf16 %v1056, %v1054
        %v1059 = vpack.c.bf16 %v1057, %v1055
        %1060 = vst [vmem:[#allocation2 + $0x70] sm:$0xff] %v1058
        %1061 = vst [vmem:[#allocation2 + $0x78] sm:$0xff] %v1059
        %1062 = vrot.lane.b32.xlu0 %v669, 111
        %v1063 = vpop.permute.xlu0 %1062
        %1064 = vrot.lane.b32.xlu0 %v673, 111
        %v1065 = vpop.permute.xlu0 %1064
        %1066 = vrot.lane.b32.xlu0 %v671, 111
        %v1067 = vpop.permute.xlu0 %1066
        %1068 = vrot.lane.b32.xlu0 %v675, 111
        %v1069 = vpop.permute.xlu0 %1068
        %vm1070 = vcmp.lt.s32.totalorder %v795, 111
        %v1071 = vsel %vm1070, %v1063, %v1067
        %v1072 = vsel %vm1070, %v1065, %v1069
        %v1073 = vsel %vm1070, %v1067, %v1063
        %v1074 = vsel %vm1070, %v1069, %v1065
        %vm1075 = vmand %vm1006, %vm876
        %vm1076 = vmand %vm1075, %vm878
        %v1077 = vsel %vm1076, 1, 0
        %v1078 = vlaneseq
        %v1079 = vshrl.u32 %v1078, 7
        %v1080 = vsub.s32 0, %v1079
        %v1081 = vrot.slane %v1077, %v1080
        %v1082 = vlaneseq
        %v1083 = vshrl.u32 %v1082, 7
        %v1084 = vsub.s32 1, %v1083
        %v1085 = vrot.slane %v1077, %v1084
        %vm1086 = vcmp.eq.s32.totalorder %v1081, 1
        %vm1087 = vcmp.eq.s32.totalorder %v1085, 1
        %v1088 = vsel %vm1086, %v1071, 0.0
        %v1089 = vsel %vm1087, %v1073, 0.0
        %v1090 = vsel %vm1086, %v1072, 0.0
        %v1091 = vsel %vm1087, %v1074, 0.0
        %v1092 = vpack.c.bf16 %v1090, %v1088
        %v1093 = vpack.c.bf16 %v1091, %v1089
        %1094 = vst [vmem:[#allocation2 + $0x80] sm:$0xff] %v1092
        %1095 = vst [vmem:[#allocation2 + $0x88] sm:$0xff] %v1093
        %v1096 = vld [vmem:[%s9] sm:$0xff]
        %v1097 = vld [vmem:[#allocation2] sm:$0xff]
        %v1098 = vld [vmem:[#allocation2 + $0x8] sm:$0xff]
        %v1099 = vld [vmem:[#allocation2 + $0x10] sm:$0xff]
        %v1100 = vld [vmem:[#allocation2 + $0x18] sm:$0xff]
        %v1101 = vld [vmem:[#allocation2 + $0x20] sm:$0xff]
        %v1102 = vld [vmem:[#allocation2 + $0x28] sm:$0xff]
        %v1103 = vld [vmem:[#allocation2 + $0x30] sm:$0xff]
        %v1104 = vld [vmem:[#allocation2 + $0x38] sm:$0xff]
        %v1105 = vld [vmem:[#allocation2 + $0x40] sm:$0xff]
        %v1106 = vld [vmem:[#allocation2 + $0x48] sm:$0xff]
        %v1107 = vld [vmem:[#allocation2 + $0x50] sm:$0xff]
        %v1108 = vld [vmem:[#allocation2 + $0x58] sm:$0xff]
        %v1109 = vld [vmem:[#allocation2 + $0x60] sm:$0xff]
        %v1110 = vld [vmem:[#allocation2 + $0x68] sm:$0xff]
        %v1111 = vld [vmem:[#allocation2 + $0x70] sm:$0xff]
        %v1112 = vld [vmem:[#allocation2 + $0x78] sm:$0xff]
        %v1113 = vld [vmem:[#allocation2 + $0x80] sm:$0xff]
        %v1114 = vld [vmem:[#allocation2 + $0x88] sm:$0xff]
        %v1115 = vld [vmem:[%s10] sm:$0xff]
        %1117 = vset.pattern.permute.xlu0 0
        %1118 = vperm.xlu0 %1117, %v1115
        %v1119 = vpop.permute.xlu0 %1118
        %v1122 = vunpack.c.l.b16 %v1096
        %v1123 = vunpack.c.h.b16 %v1096
        %v1124 = vpack.c.b16 %v1122, %v1122
        %v1125 = vpack.c.b16 %v1123, %v1123
        %vm1127 = vcmask 130048
        %v1129 = vsel %vm1127, %v1125, 0
        %1131 = vmatprep.subr.bf16.mxu0 %v1098
        %1132 = vmatpush1.bf16.msra.mxu0 %v1097
        %1133 = vmatprep.subr.bf16.mxu0 %v1100
        %1134 = vmatpush1.bf16.msra.mxu0 %v1099
        %1135 = vmatprep.subr.bf16.mxu0 %v1102
        %1136 = vmatpush1.bf16.msra.mxu0 %v1101
        %1137 = vmatprep.subr.bf16.mxu0 %v1104
        %1138 = vmatpush1.bf16.msra.mxu0 %v1103
        %1139 = vmatprep.subr.bf16.mxu0 %v1106
        %1140 = vmatpush1.bf16.msra.mxu0 %v1105
        %1141 = vmatprep.subr.bf16.mxu0 %v1108
        %1142 = vmatpush1.bf16.msra.mxu0 %v1107
        %1143 = vmatprep.subr.bf16.mxu0 %v1110
        %1144 = vmatpush1.bf16.msra.mxu0 %v1109
        %1145 = vmatprep.subr.bf16.mxu0 %v1112
        %1146 = vmatpush1.bf16.msra.mxu0 %v1111
        %1147 = vmatprep.subr.bf16.mxu0 %v1114
        %1148 = vmatpush1.bf16.msra.mxu0 %v1113
        %1149 = vmatprep.subr.bf16.mxu0 0
        %1150 = vmatpush1.bf16.msra.mxu0 0
        %1151 = vmatprep.subr.bf16.mxu0 0
        %1152 = vmatpush1.bf16.msra.mxu0 0
        %1153 = vmatprep.subr.bf16.mxu0 0
        %1154 = vmatpush1.bf16.msra.mxu0 0
        %1155 = vmatprep.subr.bf16.mxu0 0
        %1156 = vmatpush1.bf16.msra.mxu0 0
        %1157 = vmatprep.subr.bf16.mxu0 0
        %1158 = vmatpush1.bf16.msra.mxu0 0
        %1159 = vmatprep.subr.bf16.mxu0 0
        %1160 = vmatpush1.bf16.msra.mxu0 0
        %1161 = vmatprep.subr.bf16.mxu0 0
        %1162 = vmatpush1.bf16.msra.mxu0 0
        %1163 = vmatprep.mubr.bf16.mxu0 %v1129
        %1164 = vmatmul.mubr.bf16.gmra.mrb[0].mxu0 %v1124
        %v1165 = vpop.f32.mrb[0].mxu0
        %v1166 = vadd.f32 %v1119, %v1165
        %v1167 = vpop.f32.mrb[0].mxu0
        %v1168 = vadd.f32 %v1119, %v1167
        %v1169 = vpop.f32.mrb[0].mxu0
        %v1170 = vpop.f32.mrb[0].mxu0
        %1171 = vdwg.mxu0
        %v1172 = vld [vmem:[%s11] sm:$0xf]
        %v1173 = vpack.c.bf16 %v779, %v775
        %v1174 = vpack.c.bf16 %v781, %v777
        %v1176 = vsel %vm1127, %v1172, 0
        %1178 = vmatprep.subr.bf16.mxu0 %v1174
        %1179 = vmatpush1.bf16.msra.mxu0 %v1173
        %1180 = vmatprep.subr.bf16.mxu0 0
        %1181 = vmatpush1.bf16.msra.mxu0 0
        %1182 = vmatprep.subr.bf16.mxu0 0
        %1183 = vmatpush1.bf16.msra.mxu0 0
        %1184 = vmatprep.subr.bf16.mxu0 0
        %1185 = vmatpush1.bf16.msra.mxu0 0
        %1186 = vmatprep.subr.bf16.mxu0 0
        %1187 = vmatpush1.bf16.msra.mxu0 0
        %1188 = vmatprep.subr.bf16.mxu0 0
        %1189 = vmatpush1.bf16.msra.mxu0 0
        %1190 = vmatprep.subr.bf16.mxu0 0
        %1191 = vmatpush1.bf16.msra.mxu0 0
        %1192 = vmatprep.subr.bf16.mxu0 0
        %1193 = vmatpush1.bf16.msra.mxu0 0
        %1194 = vmatprep.subr.bf16.mxu0 0
        %1195 = vmatpush1.bf16.msra.mxu0 0
        %1196 = vmatprep.subr.bf16.mxu0 0
        %1197 = vmatpush1.bf16.msra.mxu0 0
        %1198 = vmatprep.subr.bf16.mxu0 0
        %1199 = vmatpush1.bf16.msra.mxu0 0
        %1200 = vmatprep.subr.bf16.mxu0 0
        %1201 = vmatpush1.bf16.msra.mxu0 0
        %1202 = vmatprep.subr.bf16.mxu0 0
        %1203 = vmatpush1.bf16.msra.mxu0 0
        %1204 = vmatprep.subr.bf16.mxu0 0
        %1205 = vmatpush1.bf16.msra.mxu0 0
        %1206 = vmatprep.subr.bf16.mxu0 0
        %1207 = vmatpush1.bf16.msra.mxu0 0
        %1208 = vmatprep.subr.bf16.mxu0 0
        %1209 = vmatpush1.bf16.msra.mxu0 0
        %1210 = vmatprep.mubr.bf16.mxu0 0
        %1211 = vmatmul.mubr.bf16.gmra.mrb[0].mxu0 %v1176
        %v1212 = vpop.f32.mrb[0].mxu0
        %v1213 = vadd.f32 0.0, %v1212
        %v1214 = vpop.f32.mrb[0].mxu0
        %v1215 = vadd.f32 0.0, %v1214
        %v1216 = vpop.f32.mrb[0].mxu0
        %v1217 = vpop.f32.mrb[0].mxu0
        %1218 = vdwg.mxu0
        %v1219 = vadd.f32 %v1166, %v1168
        %1220 = vadd.xlane.f32.xlu0 %v1219
        %v1221 = vpop.xlane.xlu0 %1220
        %v1222 = vmul.f32 %v1221, 0.00390625
        %v1223 = vadd.f32 %v1213, %v1215
        %1224 = vadd.xlane.f32.xlu0 %v1223
        %v1225 = vpop.xlane.xlu0 %1224
        %v1226 = vmul.f32 %v1225, 0.00390625
        %v1227 = vrot.slane %v1222, 4
        %v1228 = vmax.f32 %v1222, %v1227
        %v1229 = vrot.slane %v1228, 2
        %v1230 = vmax.f32 %v1228, %v1229
        %v1231 = vrot.slane %v1230, 1
        %v1232 = vmax.f32 %v1230, %v1231
        %s1233 = vtos %v1232
        %v1234 = vstv %s1233
        %v1235 = vrot.slane %v1226, 4
        %v1236 = vmax.f32 %v1226, %v1235
        %v1237 = vrot.slane %v1236, 2
        %v1238 = vmax.f32 %v1236, %v1237
        %v1239 = vrot.slane %v1238, 1
        %v1240 = vmax.f32 %v1238, %v1239
        %s1241 = vtos %v1240
        %v1242 = vstv %s1241
        %v1243 = vmax.f32 %v1234, %v1242
        %v1244 = vsub.f32 %v1222, %v1243
        %v1245 = vmul.f32 %v1244, 1.442695
        %v1246 = vpow.pop %v1245
        %v1247 = vsub.f32 %v1226, %v1243
        %v1248 = vmul.f32 %v1247, 1.442695
        %v1249 = vpow.pop %v1248
        %v1250 = vsel %vm424, %v1246, 0.0
        %1251 = vadd.xlane.f32.xlu0 %v1250
        %v1252 = vpop.xlane.xlu0 %1251
        %v1253 = vrot.slane %v1252, 4
        %v1254 = vadd.f32 %v1252, %v1253
        %v1255 = vrot.slane %v1254, 2
        %v1256 = vadd.f32 %v1254, %v1255
        %v1257 = vrot.slane %v1256, 1
        %v1258 = vadd.f32 %v1256, %v1257
        %s1259 = vtos %v1258
        %v1260 = vstv %s1259
        %v1261 = vsel %vm424, %v1249, 0.0
        %1262 = vadd.xlane.f32.xlu0 %v1261
        %v1263 = vpop.xlane.xlu0 %1262
        %v1264 = vrot.slane %v1263, 4
        %v1265 = vadd.f32 %v1263, %v1264
        %v1266 = vrot.slane %v1265, 2
        %v1267 = vadd.f32 %v1265, %v1266
        %v1268 = vrot.slane %v1267, 1
        %v1269 = vadd.f32 %v1267, %v1268
        %s1270 = vtos %v1269
        %v1271 = vstv %s1270
        %v1272 = vadd.f32 %v1260, %v1271
        %v1273 = vrcp.pop %v1272
        %v1274 = vmul.f32 1.0, %v1273
        %v1275 = vmul.f32 %v1246, %v1274
        %v1276 = vmul.f32 %v1166, %v1275
        %v1277 = vmul.f32 %v1168, %v1275
        %v1278 = vmul.f32 %v1249, %v1274
        %v1279 = vmul.f32 %v1213, %v1278
        %v1280 = vmul.f32 %v1215, %v1278
        %v1281 = vadd.f32 %v1276, %v1279
        %v1282 = vadd.f32 %v1277, %v1280
        %1283 = vst [vmem:[%s406] sm:$0xff] %v1281
        %1284 = vst [vmem:[%s406 + $0x8] sm:$0xff] %v1282
        %s1285 = sand.u32 %s291, 1
        %s1286 = scalar_lea.sflag [#allocation4], %s1285
        %s1287 = sand.u32 %s291, 1
        %s1288 = smul.addr %s1287, 16
        %s1289 = scalar_lea.vmem [#allocation3], %s1288
        // Predicated region
        $region69: #{tpu_custom_call.1} parent=67 // pred_check
          %p1290 = pneg %p301
        $region70: #{tpu_custom_call.1} parent=67 // pred_check_branch
          %1292 = sbr.rel (%p1290) target = $region72
        $region71: #{tpu_custom_call.1} parent=67 // pred_region
          %s1294 = ssub.s32 256, 256
          %1295 = vsyncadd %s1286, %s1294
          %s1296 = smul.addr %s26, 2
          %s1297 = smul.addr %s1296, 128
          %s1298 = scalar_lea.hbm %s12, %s1297
          %s1300 = sshll.u32 %s1289, 4
          %s1301 = int_to_ptr.vmem [resolvable:$true] %s1300
          %1303 = dma.vmem_to_hbm [thread:$0]  %s1301, 256, %s1298, %s1286
        $region72: #{tpu_custom_call.1} parent=67 // pred_fallthru
          _
      $region68: #{tpu_custom_call.1} parent=5 // pred_fallthru
        _
      %p1304 = scmp.le.s32.totalorder 2, %s21
      // Predicated region
      $region73: #{tpu_custom_call.1} parent=5 // pred_check
        %p1305 = pneg %p1304
      $region74: #{tpu_custom_call.1} parent=5 // pred_check_branch
        %1307 = sbr.rel (%p1305) target = $region76
      $region75: #{tpu_custom_call.1} parent=5 // pred_region
        %s1308 = ssub.s32 %s21, 2
        // Predicated region
        $region77: #{tpu_custom_call.1} parent=75 // pred_check
          %p1309 = pneg %p307
        $region78: #{tpu_custom_call.1} parent=75 // pred_check_branch
          %1311 = sbr.rel (%p1309) target = $region80
        $region79: #{tpu_custom_call.1} parent=75 // pred_region
          %s1312 = sand.u32 %s292, 1
          %s1313 = scalar_lea.sflag [#allocation4], %s1312
          %s1314 = sand.u32 %s292, 1
          %s1315 = smul.addr %s1314, 16
          %s1316 = scalar_lea.vmem [#allocation3], %s1315
          %1317 = dma.done %s1313, 256
        $region80: #{tpu_custom_call.1} parent=75 // pred_fallthru
          _
      $region76: #{tpu_custom_call.1} parent=5 // pred_fallthru
        _
    $region6: #{tpu_custom_call.1} parent=1 // loop_footer
      %s25 = sadd.s32 1, %s21
    $region7: #{tpu_custom_call.1} parent=1 // loop_footer_branch
      %20 = sbr.rel target = $region3
    $region8: #{tpu_custom_call.1} parent=1 // loop_exit
      _
    %1318 = vsyncpa [#allocation4], 1
    %s1319 = scalar_lea.sflag [#allocation4], 1
    %1320 = vsyncpa %s1319, 1

</llo_original>
